<compile_context>
chip_gen: v5e
topology: v5e:2x2
jax: 0.10.0
libtpu: 0.0.40
codegen_flags: <defaults>
</compile_context>

<pallas_src>
from functools import partial

import numpy as np

import jax
import jax.numpy as jnp
from jax import lax
from jax.experimental import pallas as pl
from jax.experimental.pallas import tpu as pltpu


# --------------------------------------------------------------------------
# generation-aware VMEM budget
# --------------------------------------------------------------------------
_VMEM_LIMIT = None


def vmem_limit_bytes():
    """75% of physical VMEM (48 MiB on v7x, 96 MiB on v5e/v6e); safe fallback 48 MiB."""
    global _VMEM_LIMIT
    if _VMEM_LIMIT is None:
        limit = 48 * 1024 * 1024  # safe on every generation (v7x physical VMEM is 64 MiB)
        try:
            cap = getattr(pltpu.get_tpu_info(), "vmem_capacity_bytes", None)
            if cap:
                limit = int(cap) * 3 // 4
        except Exception:
            pass
        _VMEM_LIMIT = limit
    return _VMEM_LIMIT


# --------------------------------------------------------------------------
# sinusoid positional table (identical to the PyTorch helper, pure numpy)
# --------------------------------------------------------------------------
def get_sinusoid_encoding_table(n_position, d_hid):
    def get_position_angle_vec(position):
        return [position / np.power(10000, 2 * (j // 2) / d_hid) for j in range(d_hid)]

    table = np.array([get_position_angle_vec(p) for p in range(n_position)], dtype=np.float64)
    table[:, 0::2] = np.sin(table[:, 0::2])
    table[:, 1::2] = np.cos(table[:, 1::2])
    return table.astype(np.float32)  # (N, D)


# --------------------------------------------------------------------------
# spec helpers
# --------------------------------------------------------------------------
def _const_spec(shape):
    """BlockSpec for a grid-constant (replicated) operand: single-buffered."""
    index_map = lambda *_: (0,) * len(shape)
    try:
        return pl.BlockSpec(shape, index_map, pipeline_mode=pl.Buffered(buffer_count=1))
    except (TypeError, AttributeError):
        # Older API without pipeline_mode / Buffered: fall back to default buffering.
        return pl.BlockSpec(shape, index_map)


def _layernorm(v, w, b, eps=1e-5):
    mu = jnp.mean(v, axis=-1, keepdims=True)
    var = jnp.mean((v - mu) ** 2, axis=-1, keepdims=True)
    return (v - mu) * lax.rsqrt(var + eps) * w + b


# --------------------------------------------------------------------------
# Pallas kernels
# --------------------------------------------------------------------------
def _patch_embed_kernel(x_ref, w_ref, b_ref, pos_ref, o_ref):
    # x: (1, N, K) bf16, w: (K, D) bf16, b: (1, D) f32, pos: (N, D) f32 -> o: (1, N, D) f32
    o_ref[0] = (
        jnp.dot(x_ref[0], w_ref[...], preferred_element_type=jnp.float32)
        + b_ref[...]
        + pos_ref[...]
    )


def make_blocks_kernel(num_heads, head_dim):
    """Fused transformer stack: one grid step = one (batch element, layer) pair."""
    D = num_heads * head_dim
    c0 = 0.7978845608028654  # sqrt(2/pi)
    c1 = 0.044715

    def kernel(x_ref, ln1w_ref, ln1b_ref, qkvw_ref, qkvb_ref,
               projw_ref, projb_ref, ln2w_ref, ln2b_ref,
               fc1w_ref, fc1b_ref, fc2w_ref, fc2b_ref,
               o_ref, acc_ref, attn_ref):
        l = pl.program_id(1)

        # layer 0: load the residual stream from HBM into the VMEM accumulator
        @pl.when(l == 0)
        def _():
            acc_ref[...] = x_ref[0]

        x = acc_ref[...]                                       # (N, D) f32 residual

        # ---- Attention branch ----
        xn = _layernorm(x, ln1w_ref[0], ln1b_ref[0]).astype(jnp.bfloat16)
        qkv = jnp.dot(xn, qkvw_ref[0], preferred_element_type=jnp.float32) + qkvb_ref[0]
        qkv_bf = qkv.astype(jnp.bfloat16)                      # single full-width cast

        for h in range(num_heads):
            # attention scale is already folded into the Q columns of qkv_w/qkv_b
            q = qkv_bf[:, h * head_dim:(h + 1) * head_dim]               # (N, hd)
            k = qkv_bf[:, D + h * head_dim:D + (h + 1) * head_dim]
            v = qkv_bf[:, 2 * D + h * head_dim:2 * D + (h + 1) * head_dim]
            # scores = q @ k^T, contracting the last dims (no materialized transpose)
            s = lax.dot_general(q, k, (((1,), (1,)), ((), ())),
                                preferred_element_type=jnp.float32)      # (N, N) f32
            s = s - jnp.max(s, axis=-1, keepdims=True)
            p = jnp.exp(s)
            p = p * pl.reciprocal(jnp.sum(p, axis=-1, keepdims=True), approx=True)
            # per-head write into VMEM scratch (no lane-axis concatenate)
            attn_ref[:, h * head_dim:(h + 1) * head_dim] = jnp.dot(
                p.astype(jnp.bfloat16), v,
                preferred_element_type=jnp.float32).astype(jnp.bfloat16)

        x = x + (jnp.dot(attn_ref[...], projw_ref[0],
                         preferred_element_type=jnp.float32) + projb_ref[0])

        # ---- MLP branch ----
        xn2 = _layernorm(x, ln2w_ref[0], ln2b_ref[0]).astype(jnp.bfloat16)
        h1 = jnp.dot(xn2, fc1w_ref[0], preferred_element_type=jnp.float32) + fc1b_ref[0]
        # tanh-approximate GELU (EUP tanh instead of VALU erf polynomial)
        h1 = 0.5 * h1 * (1.0 + jnp.tanh(c0 * (h1 + c1 * h1 * h1 * h1)))
        h1 = h1.astype(jnp.bfloat16)
        x = x + (jnp.dot(h1, fc2w_ref[0], preferred_element_type=jnp.float32) + fc2b_ref[0])

        acc_ref[...] = x

        # last layer: write the residual back to HBM once per batch element
        @pl.when(l == pl.num_programs(1) - 1)
        def _():
            o_ref[0] = x

    return kernel


def _head_kernel(x_ref, fnw_ref, fnb_ref, hw_ref, hb_ref, o_ref):
    # x: (1, N, D) f32 -> mean over N -> fc_norm (LayerNorm) -> padded head matmul
    m = jnp.mean(x_ref[0], axis=0, keepdims=True)                          # (1, D)
    mn = _layernorm(m, fnw_ref[...], fnb_ref[...])
    o_ref[0] = (jnp.dot(mn.astype(jnp.bfloat16), hw_ref[...],
                        preferred_element_type=jnp.float32) + hb_ref[...])


# --------------------------------------------------------------------------
# Python wrappers calling pallas_call
# --------------------------------------------------------------------------
def patch_embed_forward(x, w2d, conv_b, pos, *, tubelet_size, patch_size):
    """x: (B, C, T, H, W) f32; w2d: (K, D) bf16; conv_b: (1, D); pos: (N, D)."""
    B, C, T, H, W = x.shape
    K, D = w2d.shape
    tt, ph, pw = tubelet_size, patch_size, patch_size
    Tp, Hp, Wp = T // tt, H // ph, W // pw
    N = Tp * Hp * Wp

    # Conv3d(stride == kernel) == patchify + matmul.  Cast to bf16 BEFORE the
    # transpose so the materialized (B, N, K) intermediate is half the bytes.
    patches = x.astype(jnp.bfloat16).reshape(B, C, Tp, tt, Hp, ph, Wp, pw)
    patches = patches.transpose(0, 2, 4, 6, 1, 3, 5, 7).reshape(B, N, K)

    return pl.pallas_call(
        _patch_embed_kernel,
        out_shape=jax.ShapeDtypeStruct((B, N, D), jnp.float32),
        grid=(B,),                                   # row-tiled (one sample per step)
        in_specs=[
            pl.BlockSpec((1, N, K), lambda b: (b, 0, 0)),
            _const_spec((K, D)),                     # weight resident, single-buffered
            _const_spec((1, D)),
            _const_spec((N, D)),                     # pos passed once, never tiled over B
        ],
        out_specs=pl.BlockSpec((1, N, D), lambda b: (b, 0, 0)),
        compiler_params=pltpu.CompilerParams(
            dimension_semantics=("parallel",),
            vmem_limit_bytes=vmem_limit_bytes()),
    )(patches, w2d, conv_b, pos)


def blocks_forward(x, bp, num_heads):
    """Whole transformer stack in a single pallas_call, grid=(B, depth)."""
    B, N, D = x.shape
    depth = bp["ln1_w"].shape[0]
    Hm = bp["fc1_w"].shape[2]
    head_dim = D // num_heads
    kernel = make_blocks_kernel(num_heads, head_dim)

    # depth-indexed weight blocks: double-buffered so layer l+1 weights prefetch
    # while layer l computes.
    def wspec(s):
        return pl.BlockSpec((1,) + s, lambda b, l: (l,) + (0,) * len(s))

    in_specs = [
        pl.BlockSpec((1, N, D), lambda b, l: (b, 0, 0)),   # residual input (read at l==0)
        wspec((1, D)), wspec((1, D)),                      # ln1 w, b
        wspec((D, 3 * D)), wspec((1, 3 * D)),              # qkv w, b (scale folded into Q)
        wspec((D, D)), wspec((1, D)),                      # proj w, b
        wspec((1, D)), wspec((1, D)),                      # ln2 w, b
        wspec((D, Hm)), wspec((1, Hm)),                    # fc1 w, b
        wspec((Hm, D)), wspec((1, D)),                     # fc2 w, b
    ]
    return pl.pallas_call(
        kernel,
        out_shape=jax.ShapeDtypeStruct((B, N, D), jnp.float32),
        grid=(B, depth),
        in_specs=in_specs,
        out_specs=pl.BlockSpec((1, N, D), lambda b, l: (b, 0, 0)),
        scratch_shapes=[pltpu.VMEM((N, D), jnp.float32),     # residual accumulator
                        pltpu.VMEM((N, D), jnp.bfloat16)],   # per-head attention output
        compiler_params=pltpu.CompilerParams(
            dimension_semantics=("parallel", "arbitrary"),
            vmem_limit_bytes=vmem_limit_bytes()),
    )(x, bp["ln1_w"], bp["ln1_b"], bp["qkv_w"], bp["qkv_b"],
      bp["proj_w"], bp["proj_b"], bp["ln2_w"], bp["ln2_b"],
      bp["fc1_w"], bp["fc1_b"], bp["fc2_w"], bp["fc2_b"])


def head_forward(x, fn_w, fn_b, head_w_pad, head_b_pad):
    B, N, D = x.shape
    P = head_w_pad.shape[1]                          # lane-padded class dim (>= 128)
    return pl.pallas_call(
        _head_kernel,
        out_shape=jax.ShapeDtypeStruct((B, 1, P), jnp.float32),
        grid=(B,),                                   # per-sample, both TCs usable
        in_specs=[
            pl.BlockSpec((1, N, D), lambda b: (b, 0, 0)),
            _const_spec((1, D)), _const_spec((1, D)),
            _const_spec((D, P)), _const_spec((1, P)),
        ],
        out_specs=pl.BlockSpec((1, 1, P), lambda b: (b, 0, 0)),
        compiler_params=pltpu.CompilerParams(
            dimension_semantics=("parallel",),
            vmem_limit_bytes=vmem_limit_bytes()),
    )(x, fn_w, fn_b, head_w_pad, head_b_pad)


def vit_forward(x, params, *, num_heads, num_classes, tubelet_size, patch_size):
    h = patch_embed_forward(x, params["conv_w2d"], params["conv_b"], params["pos"],
                            tubelet_size=tubelet_size, patch_size=patch_size)
    h = blocks_forward(h, params["blocks"], num_heads)
    # use_mean_pooling=True -> self.norm is Identity, fc_norm(x.mean(1)), then head.
    logits_pad = head_forward(h, params["fc_norm_w"], params["fc_norm_b"],
                              params["head_w_pad"], params["head_b_pad"])
    return logits_pad[:, 0, :num_classes]            # drop lane padding outside the kernel


# --------------------------------------------------------------------------
# deterministic parameter construction (bf16 matmul weights, f32 everything else)
# --------------------------------------------------------------------------
def trunc_normal(key, shape, std=0.02):
    return jax.random.truncated_normal(key, -2.0, 2.0, shape, jnp.float32) * std


def build_params(key, *, in_chans, embed_dim, depth, num_heads, mlp_ratio,
                 num_classes, tubelet_size, patch_size, num_patches, init_scale):
    D = embed_dim
    Hm = int(D * mlp_ratio)
    K = in_chans * tubelet_size * patch_size * patch_size
    head_dim = D // num_heads
    scale = head_dim ** -0.5
    keys = jax.random.split(key, 2 + depth)

    conv_w = trunc_normal(keys[0], (D, in_chans, tubelet_size, patch_size, patch_size))
    conv_w2d = conv_w.reshape(D, K).T.astype(jnp.bfloat16)       # (K, D)

    blk = {k: [] for k in ("ln1_w", "ln1_b", "qkv_w", "qkv_b", "proj_w", "proj_b",
                           "ln2_w", "ln2_b", "fc1_w", "fc1_b", "fc2_w", "fc2_b")}
    for i in range(depth):
        bk = jax.random.split(keys[2 + i], 4)
        qkv_w = trunc_normal(bk[0], (D, 3 * D))
        # Fold attention scale (head_dim**-0.5) into the Q columns of the fused
        # QKV weight and bias -> no per-head scale multiply inside the kernel.
        qkv_w = qkv_w.at[:, :D].multiply(scale)
        qkv_b = jnp.zeros((1, 3 * D), jnp.float32).at[:, :D].multiply(scale)
        blk["ln1_w"].append(jnp.ones((1, D), jnp.float32))
        blk["ln1_b"].append(jnp.zeros((1, D), jnp.float32))
        blk["qkv_w"].append(qkv_w.astype(jnp.bfloat16))
        blk["qkv_b"].append(qkv_b)
        blk["proj_w"].append(trunc_normal(bk[1], (D, D)).astype(jnp.bfloat16))
        blk["proj_b"].append(jnp.zeros((1, D), jnp.float32))
        blk["ln2_w"].append(jnp.ones((1, D), jnp.float32))
        blk["ln2_b"].append(jnp.zeros((1, D), jnp.float32))
        blk["fc1_w"].append(trunc_normal(bk[2], (D, Hm)).astype(jnp.bfloat16))
        blk["fc1_b"].append(jnp.zeros((1, Hm), jnp.float32))
        blk["fc2_w"].append(trunc_normal(bk[3], (Hm, D)).astype(jnp.bfloat16))
        blk["fc2_b"].append(jnp.zeros((1, D), jnp.float32))
    blocks = {k: jnp.stack(v) for k, v in blk.items()}           # leading depth axis

    # classifier padded to a lane-dense (multiple of 128) output width
    cls_pad = max(128, ((num_classes + 127) // 128) * 128)
    head_w = trunc_normal(keys[1], (D, num_classes)) * init_scale
    head_w_pad = jnp.zeros((D, cls_pad), jnp.float32).at[:, :num_classes].set(head_w)
    head_w_pad = head_w_pad.astype(jnp.bfloat16)
    head_b_pad = jnp.zeros((1, cls_pad), jnp.float32)

    pos = jnp.asarray(get_sinusoid_encoding_table(num_patches, D))

    return dict(
        conv_w2d=conv_w2d, conv_b=jnp.zeros((1, D), jnp.float32), pos=pos, blocks=blocks,
        fc_norm_w=jnp.ones((1, D), jnp.float32), fc_norm_b=jnp.zeros((1, D), jnp.float32),
        head_w_pad=head_w_pad, head_b_pad=head_b_pad,
    )


# --------------------------------------------------------------------------
if __name__ == "__main__":
    # Small config consistent with the module's constructor.
    B, in_chans = 2, 3
    img_size, patch_size = 16, 8
    all_frames, tubelet_size = 4, 2
    embed_dim, depth, num_heads, mlp_ratio = 32, 2, 4, 4.0
    num_classes = 7
    init_scale = 1.0  # PyTorch default 0.0 would zero the head output

    Tp = all_frames // tubelet_size
    Hp = Wp = img_size // patch_size
    num_patches = Tp * Hp * Wp  # 8

    key = jax.random.PRNGKey(0)
    kparam, kx = jax.random.split(key)
    params = build_params(
        kparam, in_chans=in_chans, embed_dim=embed_dim, depth=depth,
        num_heads=num_heads, mlp_ratio=mlp_ratio, num_classes=num_classes,
        tubelet_size=tubelet_size, patch_size=patch_size,
        num_patches=num_patches, init_scale=init_scale,
    )

    # layout: NCTHW, same as the PyTorch module input.
    x = jax.random.normal(kx, (B, in_chans, all_frames, img_size, img_size), jnp.float32)

    fwd = jax.jit(partial(vit_forward, num_heads=num_heads, num_classes=num_classes,
                          tubelet_size=tubelet_size, patch_size=patch_size))
    out = jax.block_until_ready(fwd(x, params))
    assert out.shape == (B, num_classes)
    print("KERNEL_OK")
</pallas_src>

<mosaic_0001>
module attributes {stable_mosaic.version = 11 : i64} {
  func.func @_patch_embed_kernel(%arg0: i32, %arg1: memref<1x8x384xbf16, #tpu.memory_space<vmem>>, %arg2: memref<384x32xbf16, #tpu.memory_space<vmem>>, %arg3: memref<1x32xf32, #tpu.memory_space<vmem>>, %arg4: memref<8x32xf32, #tpu.memory_space<vmem>>, %arg5: memref<1x8x32xf32, #tpu.memory_space<vmem>>) attributes {dimension_semantics = [#tpu.dimension_semantics<parallel>], iteration_bounds = array<i64: 2>, scalar_prefetch = 0 : i64, scratch_operands = 0 : i64, tpu.core_type = #tpu.core_type<tc>, window_params = [{transform_indices = @transform_0, window_bounds = array<i64: 1, 8, 384>}, {pipeline_mode = #tpu.pipeline_mode<synchronous>, transform_indices = @transform_1, window_bounds = array<i64: 384, 32>}, {pipeline_mode = #tpu.pipeline_mode<synchronous>, transform_indices = @transform_2, window_bounds = array<i64: 1, 32>}, {pipeline_mode = #tpu.pipeline_mode<synchronous>, transform_indices = @transform_3, window_bounds = array<i64: 8, 32>}, {transform_indices = @transform_4, window_bounds = array<i64: 1, 8, 32>}]} {
    %c0 = arith.constant 0 : index
    %c0_0 = arith.constant 0 : index
    %c0_1 = arith.constant 0 : index
    %0 = vector.load %arg1[%c0, %c0_0, %c0_1] : memref<1x8x384xbf16, #tpu.memory_space<vmem>>, vector<1x8x384xbf16>
    %1 = vector.shape_cast %0 : vector<1x8x384xbf16> to vector<8x384xbf16>
    %c0_2 = arith.constant 0 : index
    %c0_3 = arith.constant 0 : index
    %2 = vector.load %arg2[%c0_2, %c0_3] : memref<384x32xbf16, #tpu.memory_space<vmem>>, vector<384x32xbf16>
    %cst = arith.constant dense<0.000000e+00> : vector<8x32xf32>
    %3 = tpu.matmul %1, %2, %cst {dimension_numbers = #tpu.dot_dimension_numbers<[1], [0], [0], [1], [0, 0, 1, 1], [], []>} : vector<8x384xbf16>, vector<384x32xbf16>, vector<8x32xf32> -> vector<8x32xf32>
    %c0_4 = arith.constant 0 : index
    %c0_5 = arith.constant 0 : index
    %4 = vector.load %arg3[%c0_4, %c0_5] : memref<1x32xf32, #tpu.memory_space<vmem>>, vector<1x32xf32>
    %5 = vector.broadcast %4 : vector<1x32xf32> to vector<8x32xf32>
    %6 = arith.addf %3, %5 : vector<8x32xf32>
    %c0_6 = arith.constant 0 : index
    %c0_7 = arith.constant 0 : index
    %7 = vector.load %arg4[%c0_6, %c0_7] : memref<8x32xf32, #tpu.memory_space<vmem>>, vector<8x32xf32>
    %8 = arith.addf %6, %7 : vector<8x32xf32>
    %c0_8 = arith.constant 0 : index
    %c0_9 = arith.constant 0 : index
    %c0_10 = arith.constant 0 : index
    %9 = vector.load %arg5[%c0_8, %c0_9, %c0_10] : memref<1x8x32xf32, #tpu.memory_space<vmem>>, vector<1x8x32xf32>
    %10 = vector.shape_cast %9 : vector<1x8x32xf32> to vector<8x32xf32>
    %11 = vector.shape_cast %8 : vector<8x32xf32> to vector<1x8x32xf32>
    tpu.vector_store %arg5[%c0_8, %c0_9, %c0_10], %11 {strides = array<i32>} : memref<1x8x32xf32, #tpu.memory_space<vmem>>, vector<1x8x32xf32>,
    return
  }
  func.func @transform_0(%arg0: i32) -> (i32, i32, i32) {
    %c0_i32 = arith.constant 0 : i32
    %c0_i32_0 = arith.constant 0 : i32
    %c0_i32_1 = arith.constant 0 : i32
    return %arg0, %c0_i32, %c0_i32_0 : i32, i32, i32
  }
  func.func @transform_1(%arg0: i32) -> (i32, i32) {
    %c0_i32 = arith.constant 0 : i32
    %c0_i32_0 = arith.constant 0 : i32
    %c0_i32_1 = arith.constant 0 : i32
    return %c0_i32, %c0_i32_0 : i32, i32
  }
  func.func @transform_2(%arg0: i32) -> (i32, i32) {
    %c0_i32 = arith.constant 0 : i32
    %c0_i32_0 = arith.constant 0 : i32
    %c0_i32_1 = arith.constant 0 : i32
    return %c0_i32, %c0_i32_0 : i32, i32
  }
  func.func @transform_3(%arg0: i32) -> (i32, i32) {
    %c0_i32 = arith.constant 0 : i32
    %c0_i32_0 = arith.constant 0 : i32
    %c0_i32_1 = arith.constant 0 : i32
    return %c0_i32, %c0_i32_0 : i32, i32
  }
  func.func @transform_4(%arg0: i32) -> (i32, i32, i32) {
    %c0_i32 = arith.constant 0 : i32
    %c0_i32_0 = arith.constant 0 : i32
    %c0_i32_1 = arith.constant 0 : i32
    return %arg0, %c0_i32, %c0_i32_0 : i32, i32, i32
  }
}

module attributes {stable_mosaic.version = 11 : i64} {
  func.func @kernel(%arg0: i32, %arg1: i32, %arg2: memref<1x8x32xf32, #tpu.memory_space<vmem>>, %arg3: memref<1x1x32xf32, #tpu.memory_space<vmem>>, %arg4: memref<1x1x32xf32, #tpu.memory_space<vmem>>, %arg5: memref<1x32x96xbf16, #tpu.memory_space<vmem>>, %arg6: memref<1x1x96xf32, #tpu.memory_space<vmem>>, %arg7: memref<1x32x32xbf16, #tpu.memory_space<vmem>>, %arg8: memref<1x1x32xf32, #tpu.memory_space<vmem>>, %arg9: memref<1x1x32xf32, #tpu.memory_space<vmem>>, %arg10: memref<1x1x32xf32, #tpu.memory_space<vmem>>, %arg11: memref<1x32x128xbf16, #tpu.memory_space<vmem>>, %arg12: memref<1x1x128xf32, #tpu.memory_space<vmem>>, %arg13: memref<1x128x32xbf16, #tpu.memory_space<vmem>>, %arg14: memref<1x1x32xf32, #tpu.memory_space<vmem>>, %arg15: memref<1x8x32xf32, #tpu.memory_space<vmem>>, %arg16: memref<8x32xf32, #tpu.memory_space<vmem>>, %arg17: memref<8x32xbf16, #tpu.memory_space<vmem>>) attributes {dimension_semantics = [#tpu.dimension_semantics<parallel>, #tpu.dimension_semantics<arbitrary>], iteration_bounds = array<i64: 2, 2>, scalar_prefetch = 0 : i64, scratch_operands = 2 : i64, tpu.core_type = #tpu.core_type<tc>, window_params = [{transform_indices = @transform_0, window_bounds = array<i64: 1, 8, 32>}, {transform_indices = @transform_1, window_bounds = array<i64: 1, 1, 32>}, {transform_indices = @transform_2, window_bounds = array<i64: 1, 1, 32>}, {transform_indices = @transform_3, window_bounds = array<i64: 1, 32, 96>}, {transform_indices = @transform_4, window_bounds = array<i64: 1, 1, 96>}, {transform_indices = @transform_5, window_bounds = array<i64: 1, 32, 32>}, {transform_indices = @transform_6, window_bounds = array<i64: 1, 1, 32>}, {transform_indices = @transform_7, window_bounds = array<i64: 1, 1, 32>}, {transform_indices = @transform_8, window_bounds = array<i64: 1, 1, 32>}, {transform_indices = @transform_9, window_bounds = array<i64: 1, 32, 128>}, {transform_indices = @transform_10, window_bounds = array<i64: 1, 1, 128>}, {transform_indices = @transform_11, window_bounds = array<i64: 1, 128, 32>}, {transform_indices = @transform_12, window_bounds = array<i64: 1, 1, 32>}, {transform_indices = @transform_13, window_bounds = array<i64: 1, 8, 32>}]} {
    %c0_i32 = arith.constant 0 : i32
    %0 = arith.cmpi eq, %arg1, %c0_i32 : i32
    %1 = arith.extui %0 : i1 to i32
    %c0_i32_0 = arith.constant 0 : i32
    %2 = arith.cmpi ne, %1, %c0_i32_0 : i32
    scf.if %2 {
      %c0_81 = arith.constant 0 : index
      %c0_82 = arith.constant 0 : index
      %c0_83 = arith.constant 0 : index
      %180 = vector.load %arg2[%c0_81, %c0_82, %c0_83] : memref<1x8x32xf32, #tpu.memory_space<vmem>>, vector<1x8x32xf32>
      %181 = vector.shape_cast %180 : vector<1x8x32xf32> to vector<8x32xf32>
      %c0_84 = arith.constant 0 : index
      %c0_85 = arith.constant 0 : index
      %182 = vector.load %arg16[%c0_84, %c0_85] : memref<8x32xf32, #tpu.memory_space<vmem>>, vector<8x32xf32>
      tpu.vector_store %arg16[%c0_84, %c0_85], %181 {strides = array<i32>} : memref<8x32xf32, #tpu.memory_space<vmem>>, vector<8x32xf32>,
    } else {
    }
    %c0 = arith.constant 0 : index
    %c0_1 = arith.constant 0 : index
    %3 = vector.load %arg16[%c0, %c0_1] : memref<8x32xf32, #tpu.memory_space<vmem>>, vector<8x32xf32>
    %c0_2 = arith.constant 0 : index
    %c0_3 = arith.constant 0 : index
    %c0_4 = arith.constant 0 : index
    %4 = vector.load %arg3[%c0_2, %c0_3, %c0_4] : memref<1x1x32xf32, #tpu.memory_space<vmem>>, vector<1x1x32xf32>
    %5 = vector.shape_cast %4 : vector<1x1x32xf32> to vector<1x32xf32>
    %c0_5 = arith.constant 0 : index
    %c0_6 = arith.constant 0 : index
    %c0_7 = arith.constant 0 : index
    %6 = vector.load %arg4[%c0_5, %c0_6, %c0_7] : memref<1x1x32xf32, #tpu.memory_space<vmem>>, vector<1x1x32xf32>
    %7 = vector.shape_cast %6 : vector<1x1x32xf32> to vector<1x32xf32>
    %cst = arith.constant dense<0.000000e+00> : vector<8xf32>
    %8 = vector.multi_reduction <add>, %3, %cst [1] : vector<8x32xf32> to vector<8xf32>
    %9 = vector.shape_cast %8 : vector<8xf32> to vector<8x1xf32>
    %cst_8 = arith.constant 3.200000e+01 : f32
    %10 = vector.broadcast %cst_8 : f32 to vector<8x1xf32>
    %11 = arith.divf %9, %10 : vector<8x1xf32>
    %12 = vector.broadcast %11 : vector<8x1xf32> to vector<8x32xf32>
    %13 = arith.subf %3, %12 : vector<8x32xf32>
    %14 = arith.mulf %13, %13 : vector<8x32xf32>
    %cst_9 = arith.constant dense<0.000000e+00> : vector<8xf32>
    %15 = vector.multi_reduction <add>, %14, %cst_9 [1] : vector<8x32xf32> to vector<8xf32>
    %16 = vector.shape_cast %15 : vector<8xf32> to vector<8x1xf32>
    %cst_10 = arith.constant 3.200000e+01 : f32
    %17 = vector.broadcast %cst_10 : f32 to vector<8x1xf32>
    %18 = arith.divf %16, %17 : vector<8x1xf32>
    %19 = vector.broadcast %11 : vector<8x1xf32> to vector<8x32xf32>
    %20 = arith.subf %3, %19 : vector<8x32xf32>
    %cst_11 = arith.constant 9.99999974E-6 : f32
    %21 = vector.broadcast %cst_11 : f32 to vector<8x1xf32>
    %22 = arith.addf %18, %21 : vector<8x1xf32>
    %23 = math.rsqrt %22 : vector<8x1xf32>
    %24 = vector.broadcast %23 : vector<8x1xf32> to vector<8x32xf32>
    %25 = arith.mulf %20, %24 : vector<8x32xf32>
    %26 = vector.broadcast %5 : vector<1x32xf32> to vector<8x32xf32>
    %27 = arith.mulf %25, %26 : vector<8x32xf32>
    %28 = vector.broadcast %7 : vector<1x32xf32> to vector<8x32xf32>
    %29 = arith.addf %27, %28 : vector<8x32xf32>
    %30 = arith.truncf %29 : vector<8x32xf32> to vector<8x32xbf16>
    %c0_12 = arith.constant 0 : index
    %c0_13 = arith.constant 0 : index
    %c0_14 = arith.constant 0 : index
    %31 = vector.load %arg5[%c0_12, %c0_13, %c0_14] : memref<1x32x96xbf16, #tpu.memory_space<vmem>>, vector<1x32x96xbf16>
    %32 = vector.shape_cast %31 : vector<1x32x96xbf16> to vector<32x96xbf16>
    %cst_15 = arith.constant dense<0.000000e+00> : vector<8x96xf32>
    %33 = tpu.matmul %30, %32, %cst_15 {dimension_numbers = #tpu.dot_dimension_numbers<[1], [0], [0], [1], [0, 0, 1, 1], [], []>} : vector<8x32xbf16>, vector<32x96xbf16>, vector<8x96xf32> -> vector<8x96xf32>
    %c0_16 = arith.constant 0 : index
    %c0_17 = arith.constant 0 : index
    %c0_18 = arith.constant 0 : index
    %34 = vector.load %arg6[%c0_16, %c0_17, %c0_18] : memref<1x1x96xf32, #tpu.memory_space<vmem>>, vector<1x1x96xf32>
    %35 = vector.shape_cast %34 : vector<1x1x96xf32> to vector<1x96xf32>
    %36 = vector.broadcast %35 : vector<1x96xf32> to vector<8x96xf32>
    %37 = arith.addf %33, %36 : vector<8x96xf32>
    %38 = arith.truncf %37 : vector<8x96xf32> to vector<8x96xbf16>
    %39 = vector.extract_strided_slice %38 {offsets = [0, 0], sizes = [8, 8], strides = [1, 1]} : vector<8x96xbf16> to vector<8x8xbf16>
    %40 = vector.extract_strided_slice %38 {offsets = [0, 32], sizes = [8, 8], strides = [1, 1]} : vector<8x96xbf16> to vector<8x8xbf16>
    %41 = vector.extract_strided_slice %38 {offsets = [0, 64], sizes = [8, 8], strides = [1, 1]} : vector<8x96xbf16> to vector<8x8xbf16>
    %cst_19 = arith.constant dense<0.000000e+00> : vector<8x8xf32>
    %42 = tpu.matmul %39, %40, %cst_19 {dimension_numbers = #tpu.dot_dimension_numbers<[1], [1], [0], [0], [0, 0, 1, 0], [], []>} : vector<8x8xbf16>, vector<8x8xbf16>, vector<8x8xf32> -> vector<8x8xf32>
    %cst_20 = arith.constant dense<0xFF800000> : vector<8xf32>
    %43 = vector.multi_reduction <maximumf>, %42, %cst_20 [1] : vector<8x8xf32> to vector<8xf32>
    %44 = vector.shape_cast %43 : vector<8xf32> to vector<8x1xf32>
    %45 = vector.broadcast %44 : vector<8x1xf32> to vector<8x8xf32>
    %46 = arith.subf %42, %45 : vector<8x8xf32>
    %47 = math.exp %46 : vector<8x8xf32>
    %cst_21 = arith.constant dense<0.000000e+00> : vector<8xf32>
    %48 = vector.multi_reduction <add>, %47, %cst_21 [1] : vector<8x8xf32> to vector<8xf32>
    %49 = vector.shape_cast %48 : vector<8xf32> to vector<8x1xf32>
    %50 = tpu.reciprocal %49 {approx = true} : vector<8x1xf32> -> vector<8x1xf32>
    %51 = vector.broadcast %50 : vector<8x1xf32> to vector<8x8xf32>
    %52 = arith.mulf %47, %51 : vector<8x8xf32>
    %53 = arith.truncf %52 : vector<8x8xf32> to vector<8x8xbf16>
    %cst_22 = arith.constant dense<0.000000e+00> : vector<8x8xf32>
    %54 = tpu.matmul %53, %41, %cst_22 {dimension_numbers = #tpu.dot_dimension_numbers<[1], [0], [0], [1], [0, 0, 1, 1], [], []>} : vector<8x8xbf16>, vector<8x8xbf16>, vector<8x8xf32> -> vector<8x8xf32>
    %55 = arith.truncf %54 : vector<8x8xf32> to vector<8x8xbf16>
    %c0_23 = arith.constant 0 : index
    %c0_24 = arith.constant 0 : index
    %56 = vector.load %arg17[%c0_23, %c0_24] : memref<8x32xbf16, #tpu.memory_space<vmem>>, vector<8x8xbf16>
    tpu.vector_store %arg17[%c0_23, %c0_24], %55 {strides = array<i32>} : memref<8x32xbf16, #tpu.memory_space<vmem>>, vector<8x8xbf16>,
    %57 = vector.extract_strided_slice %38 {offsets = [0, 8], sizes = [8, 8], strides = [1, 1]} : vector<8x96xbf16> to vector<8x8xbf16>
    %58 = vector.extract_strided_slice %38 {offsets = [0, 40], sizes = [8, 8], strides = [1, 1]} : vector<8x96xbf16> to vector<8x8xbf16>
    %59 = vector.extract_strided_slice %38 {offsets = [0, 72], sizes = [8, 8], strides = [1, 1]} : vector<8x96xbf16> to vector<8x8xbf16>
    %cst_25 = arith.constant dense<0.000000e+00> : vector<8x8xf32>
    %60 = tpu.matmul %57, %58, %cst_25 {dimension_numbers = #tpu.dot_dimension_numbers<[1], [1], [0], [0], [0, 0, 1, 0], [], []>} : vector<8x8xbf16>, vector<8x8xbf16>, vector<8x8xf32> -> vector<8x8xf32>
    %cst_26 = arith.constant dense<0xFF800000> : vector<8xf32>
    %61 = vector.multi_reduction <maximumf>, %60, %cst_26 [1] : vector<8x8xf32> to vector<8xf32>
    %62 = vector.shape_cast %61 : vector<8xf32> to vector<8x1xf32>
    %63 = vector.broadcast %62 : vector<8x1xf32> to vector<8x8xf32>
    %64 = arith.subf %60, %63 : vector<8x8xf32>
    %65 = math.exp %64 : vector<8x8xf32>
    %cst_27 = arith.constant dense<0.000000e+00> : vector<8xf32>
    %66 = vector.multi_reduction <add>, %65, %cst_27 [1] : vector<8x8xf32> to vector<8xf32>
    %67 = vector.shape_cast %66 : vector<8xf32> to vector<8x1xf32>
    %68 = tpu.reciprocal %67 {approx = true} : vector<8x1xf32> -> vector<8x1xf32>
    %69 = vector.broadcast %68 : vector<8x1xf32> to vector<8x8xf32>
    %70 = arith.mulf %65, %69 : vector<8x8xf32>
    %71 = arith.truncf %70 : vector<8x8xf32> to vector<8x8xbf16>
    %cst_28 = arith.constant dense<0.000000e+00> : vector<8x8xf32>
    %72 = tpu.matmul %71, %59, %cst_28 {dimension_numbers = #tpu.dot_dimension_numbers<[1], [0], [0], [1], [0, 0, 1, 1], [], []>} : vector<8x8xbf16>, vector<8x8xbf16>, vector<8x8xf32> -> vector<8x8xf32>
    %73 = arith.truncf %72 : vector<8x8xf32> to vector<8x8xbf16>
    %c0_29 = arith.constant 0 : index
    %c8 = arith.constant 8 : index
    %74 = vector.load %arg17[%c0_29, %c8] : memref<8x32xbf16, #tpu.memory_space<vmem>>, vector<8x8xbf16>
    tpu.vector_store %arg17[%c0_29, %c8], %73 {strides = array<i32>} : memref<8x32xbf16, #tpu.memory_space<vmem>>, vector<8x8xbf16>,
    %75 = vector.extract_strided_slice %38 {offsets = [0, 16], sizes = [8, 8], strides = [1, 1]} : vector<8x96xbf16> to vector<8x8xbf16>
    %76 = vector.extract_strided_slice %38 {offsets = [0, 48], sizes = [8, 8], strides = [1, 1]} : vector<8x96xbf16> to vector<8x8xbf16>
    %77 = vector.extract_strided_slice %38 {offsets = [0, 80], sizes = [8, 8], strides = [1, 1]} : vector<8x96xbf16> to vector<8x8xbf16>
    %cst_30 = arith.constant dense<0.000000e+00> : vector<8x8xf32>
    %78 = tpu.matmul %75, %76, %cst_30 {dimension_numbers = #tpu.dot_dimension_numbers<[1], [1], [0], [0], [0, 0, 1, 0], [], []>} : vector<8x8xbf16>, vector<8x8xbf16>, vector<8x8xf32> -> vector<8x8xf32>
    %cst_31 = arith.constant dense<0xFF800000> : vector<8xf32>
    %79 = vector.multi_reduction <maximumf>, %78, %cst_31 [1] : vector<8x8xf32> to vector<8xf32>
    %80 = vector.shape_cast %79 : vector<8xf32> to vector<8x1xf32>
    %81 = vector.broadcast %80 : vector<8x1xf32> to vector<8x8xf32>
    %82 = arith.subf %78, %81 : vector<8x8xf32>
    %83 = math.exp %82 : vector<8x8xf32>
    %cst_32 = arith.constant dense<0.000000e+00> : vector<8xf32>
    %84 = vector.multi_reduction <add>, %83, %cst_32 [1] : vector<8x8xf32> to vector<8xf32>
    %85 = vector.shape_cast %84 : vector<8xf32> to vector<8x1xf32>
    %86 = tpu.reciprocal %85 {approx = true} : vector<8x1xf32> -> vector<8x1xf32>
    %87 = vector.broadcast %86 : vector<8x1xf32> to vector<8x8xf32>
    %88 = arith.mulf %83, %87 : vector<8x8xf32>
    %89 = arith.truncf %88 : vector<8x8xf32> to vector<8x8xbf16>
    %cst_33 = arith.constant dense<0.000000e+00> : vector<8x8xf32>
    %90 = tpu.matmul %89, %77, %cst_33 {dimension_numbers = #tpu.dot_dimension_numbers<[1], [0], [0], [1], [0, 0, 1, 1], [], []>} : vector<8x8xbf16>, vector<8x8xbf16>, vector<8x8xf32> -> vector<8x8xf32>
    %91 = arith.truncf %90 : vector<8x8xf32> to vector<8x8xbf16>
    %c0_34 = arith.constant 0 : index
    %c16 = arith.constant 16 : index
    %92 = vector.load %arg17[%c0_34, %c16] : memref<8x32xbf16, #tpu.memory_space<vmem>>, vector<8x8xbf16>
    tpu.vector_store %arg17[%c0_34, %c16], %91 {strides = array<i32>} : memref<8x32xbf16, #tpu.memory_space<vmem>>, vector<8x8xbf16>,
    %93 = vector.extract_strided_slice %38 {offsets = [0, 24], sizes = [8, 8], strides = [1, 1]} : vector<8x96xbf16> to vector<8x8xbf16>
    %94 = vector.extract_strided_slice %38 {offsets = [0, 56], sizes = [8, 8], strides = [1, 1]} : vector<8x96xbf16> to vector<8x8xbf16>
    %95 = vector.extract_strided_slice %38 {offsets = [0, 88], sizes = [8, 8], strides = [1, 1]} : vector<8x96xbf16> to vector<8x8xbf16>
    %cst_35 = arith.constant dense<0.000000e+00> : vector<8x8xf32>
    %96 = tpu.matmul %93, %94, %cst_35 {dimension_numbers = #tpu.dot_dimension_numbers<[1], [1], [0], [0], [0, 0, 1, 0], [], []>} : vector<8x8xbf16>, vector<8x8xbf16>, vector<8x8xf32> -> vector<8x8xf32>
    %cst_36 = arith.constant dense<0xFF800000> : vector<8xf32>
    %97 = vector.multi_reduction <maximumf>, %96, %cst_36 [1] : vector<8x8xf32> to vector<8xf32>
    %98 = vector.shape_cast %97 : vector<8xf32> to vector<8x1xf32>
    %99 = vector.broadcast %98 : vector<8x1xf32> to vector<8x8xf32>
    %100 = arith.subf %96, %99 : vector<8x8xf32>
    %101 = math.exp %100 : vector<8x8xf32>
    %cst_37 = arith.constant dense<0.000000e+00> : vector<8xf32>
    %102 = vector.multi_reduction <add>, %101, %cst_37 [1] : vector<8x8xf32> to vector<8xf32>
    %103 = vector.shape_cast %102 : vector<8xf32> to vector<8x1xf32>
    %104 = tpu.reciprocal %103 {approx = true} : vector<8x1xf32> -> vector<8x1xf32>
    %105 = vector.broadcast %104 : vector<8x1xf32> to vector<8x8xf32>
    %106 = arith.mulf %101, %105 : vector<8x8xf32>
    %107 = arith.truncf %106 : vector<8x8xf32> to vector<8x8xbf16>
    %cst_38 = arith.constant dense<0.000000e+00> : vector<8x8xf32>
    %108 = tpu.matmul %107, %95, %cst_38 {dimension_numbers = #tpu.dot_dimension_numbers<[1], [0], [0], [1], [0, 0, 1, 1], [], []>} : vector<8x8xbf16>, vector<8x8xbf16>, vector<8x8xf32> -> vector<8x8xf32>
    %109 = arith.truncf %108 : vector<8x8xf32> to vector<8x8xbf16>
    %c0_39 = arith.constant 0 : index
    %c24 = arith.constant 24 : index
    %110 = vector.load %arg17[%c0_39, %c24] : memref<8x32xbf16, #tpu.memory_space<vmem>>, vector<8x8xbf16>
    tpu.vector_store %arg17[%c0_39, %c24], %109 {strides = array<i32>} : memref<8x32xbf16, #tpu.memory_space<vmem>>, vector<8x8xbf16>,
    %c0_40 = arith.constant 0 : index
    %c0_41 = arith.constant 0 : index
    %111 = vector.load %arg17[%c0_40, %c0_41] : memref<8x32xbf16, #tpu.memory_space<vmem>>, vector<8x32xbf16>
    %c0_42 = arith.constant 0 : index
    %c0_43 = arith.constant 0 : index
    %c0_44 = arith.constant 0 : index
    %112 = vector.load %arg7[%c0_42, %c0_43, %c0_44] : memref<1x32x32xbf16, #tpu.memory_space<vmem>>, vector<1x32x32xbf16>
    %113 = vector.shape_cast %112 : vector<1x32x32xbf16> to vector<32x32xbf16>
    %cst_45 = arith.constant dense<0.000000e+00> : vector<8x32xf32>
    %114 = tpu.matmul %111, %113, %cst_45 {dimension_numbers = #tpu.dot_dimension_numbers<[1], [0], [0], [1], [0, 0, 1, 1], [], []>} : vector<8x32xbf16>, vector<32x32xbf16>, vector<8x32xf32> -> vector<8x32xf32>
    %c0_46 = arith.constant 0 : index
    %c0_47 = arith.constant 0 : index
    %c0_48 = arith.constant 0 : index
    %115 = vector.load %arg8[%c0_46, %c0_47, %c0_48] : memref<1x1x32xf32, #tpu.memory_space<vmem>>, vector<1x1x32xf32>
    %116 = vector.shape_cast %115 : vector<1x1x32xf32> to vector<1x32xf32>
    %117 = vector.broadcast %116 : vector<1x32xf32> to vector<8x32xf32>
    %118 = arith.addf %114, %117 : vector<8x32xf32>
    %119 = arith.addf %3, %118 : vector<8x32xf32>
    %c0_49 = arith.constant 0 : index
    %c0_50 = arith.constant 0 : index
    %c0_51 = arith.constant 0 : index
    %120 = vector.load %arg9[%c0_49, %c0_50, %c0_51] : memref<1x1x32xf32, #tpu.memory_space<vmem>>, vector<1x1x32xf32>
    %121 = vector.shape_cast %120 : vector<1x1x32xf32> to vector<1x32xf32>
    %c0_52 = arith.constant 0 : index
    %c0_53 = arith.constant 0 : index
    %c0_54 = arith.constant 0 : index
    %122 = vector.load %arg10[%c0_52, %c0_53, %c0_54] : memref<1x1x32xf32, #tpu.memory_space<vmem>>, vector<1x1x32xf32>
    %123 = vector.shape_cast %122 : vector<1x1x32xf32> to vector<1x32xf32>
    %cst_55 = arith.constant dense<0.000000e+00> : vector<8xf32>
    %124 = vector.multi_reduction <add>, %119, %cst_55 [1] : vector<8x32xf32> to vector<8xf32>
    %125 = vector.shape_cast %124 : vector<8xf32> to vector<8x1xf32>
    %cst_56 = arith.constant 3.200000e+01 : f32
    %126 = vector.broadcast %cst_56 : f32 to vector<8x1xf32>
    %127 = arith.divf %125, %126 : vector<8x1xf32>
    %128 = vector.broadcast %127 : vector<8x1xf32> to vector<8x32xf32>
    %129 = arith.subf %119, %128 : vector<8x32xf32>
    %130 = arith.mulf %129, %129 : vector<8x32xf32>
    %cst_57 = arith.constant dense<0.000000e+00> : vector<8xf32>
    %131 = vector.multi_reduction <add>, %130, %cst_57 [1] : vector<8x32xf32> to vector<8xf32>
    %132 = vector.shape_cast %131 : vector<8xf32> to vector<8x1xf32>
    %cst_58 = arith.constant 3.200000e+01 : f32
    %133 = vector.broadcast %cst_58 : f32 to vector<8x1xf32>
    %134 = arith.divf %132, %133 : vector<8x1xf32>
    %135 = vector.broadcast %127 : vector<8x1xf32> to vector<8x32xf32>
    %136 = arith.subf %119, %135 : vector<8x32xf32>
    %cst_59 = arith.constant 9.99999974E-6 : f32
    %137 = vector.broadcast %cst_59 : f32 to vector<8x1xf32>
    %138 = arith.addf %134, %137 : vector<8x1xf32>
    %139 = math.rsqrt %138 : vector<8x1xf32>
    %140 = vector.broadcast %139 : vector<8x1xf32> to vector<8x32xf32>
    %141 = arith.mulf %136, %140 : vector<8x32xf32>
    %142 = vector.broadcast %121 : vector<1x32xf32> to vector<8x32xf32>
    %143 = arith.mulf %141, %142 : vector<8x32xf32>
    %144 = vector.broadcast %123 : vector<1x32xf32> to vector<8x32xf32>
    %145 = arith.addf %143, %144 : vector<8x32xf32>
    %146 = arith.truncf %145 : vector<8x32xf32> to vector<8x32xbf16>
    %c0_60 = arith.constant 0 : index
    %c0_61 = arith.constant 0 : index
    %c0_62 = arith.constant 0 : index
    %147 = vector.load %arg11[%c0_60, %c0_61, %c0_62] : memref<1x32x128xbf16, #tpu.memory_space<vmem>>, vector<1x32x128xbf16>
    %148 = vector.shape_cast %147 : vector<1x32x128xbf16> to vector<32x128xbf16>
    %cst_63 = arith.constant dense<0.000000e+00> : vector<8x128xf32>
    %149 = tpu.matmul %146, %148, %cst_63 {dimension_numbers = #tpu.dot_dimension_numbers<[1], [0], [0], [1], [0, 0, 1, 1], [], []>} : vector<8x32xbf16>, vector<32x128xbf16>, vector<8x128xf32> -> vector<8x128xf32>
    %c0_64 = arith.constant 0 : index
    %c0_65 = arith.constant 0 : index
    %c0_66 = arith.constant 0 : index
    %150 = vector.load %arg12[%c0_64, %c0_65, %c0_66] : memref<1x1x128xf32, #tpu.memory_space<vmem>>, vector<1x1x128xf32>
    %151 = vector.shape_cast %150 : vector<1x1x128xf32> to vector<1x128xf32>
    %152 = vector.broadcast %151 : vector<1x128xf32> to vector<8x128xf32>
    %153 = arith.addf %149, %152 : vector<8x128xf32>
    %cst_67 = arith.constant 5.000000e-01 : f32
    %154 = vector.broadcast %cst_67 : f32 to vector<8x128xf32>
    %155 = arith.mulf %154, %153 : vector<8x128xf32>
    %cst_68 = arith.constant 4.471500e-02 : f32
    %156 = vector.broadcast %cst_68 : f32 to vector<8x128xf32>
    %157 = arith.mulf %156, %153 : vector<8x128xf32>
    %158 = arith.mulf %157, %153 : vector<8x128xf32>
    %159 = arith.mulf %158, %153 : vector<8x128xf32>
    %160 = arith.addf %153, %159 : vector<8x128xf32>
    %cst_69 = arith.constant 0.797884583 : f32
    %161 = vector.broadcast %cst_69 : f32 to vector<8x128xf32>
    %162 = arith.mulf %161, %160 : vector<8x128xf32>
    %163 = math.tanh %162 : vector<8x128xf32>
    %cst_70 = arith.constant 1.000000e+00 : f32
    %164 = vector.broadcast %cst_70 : f32 to vector<8x128xf32>
    %165 = arith.addf %164, %163 : vector<8x128xf32>
    %166 = arith.mulf %155, %165 : vector<8x128xf32>
    %167 = arith.truncf %166 : vector<8x128xf32> to vector<8x128xbf16>
    %c0_71 = arith.constant 0 : index
    %c0_72 = arith.constant 0 : index
    %c0_73 = arith.constant 0 : index
    %168 = vector.load %arg13[%c0_71, %c0_72, %c0_73] : memref<1x128x32xbf16, #tpu.memory_space<vmem>>, vector<1x128x32xbf16>
    %169 = vector.shape_cast %168 : vector<1x128x32xbf16> to vector<128x32xbf16>
    %cst_74 = arith.constant dense<0.000000e+00> : vector<8x32xf32>
    %170 = tpu.matmul %167, %169, %cst_74 {dimension_numbers = #tpu.dot_dimension_numbers<[1], [0], [0], [1], [0, 0, 1, 1], [], []>} : vector<8x128xbf16>, vector<128x32xbf16>, vector<8x32xf32> -> vector<8x32xf32>
    %c0_75 = arith.constant 0 : index
    %c0_76 = arith.constant 0 : index
    %c0_77 = arith.constant 0 : index
    %171 = vector.load %arg14[%c0_75, %c0_76, %c0_77] : memref<1x1x32xf32, #tpu.memory_space<vmem>>, vector<1x1x32xf32>
    %172 = vector.shape_cast %171 : vector<1x1x32xf32> to vector<1x32xf32>
    %173 = vector.broadcast %172 : vector<1x32xf32> to vector<8x32xf32>
    %174 = arith.addf %170, %173 : vector<8x32xf32>
    %175 = arith.addf %119, %174 : vector<8x32xf32>
    %c0_78 = arith.constant 0 : index
    %c0_79 = arith.constant 0 : index
    %176 = vector.load %arg16[%c0_78, %c0_79] : memref<8x32xf32, #tpu.memory_space<vmem>>, vector<8x32xf32>
    tpu.vector_store %arg16[%c0_78, %c0_79], %175 {strides = array<i32>} : memref<8x32xf32, #tpu.memory_space<vmem>>, vector<8x32xf32>,
    %c1_i32 = arith.constant 1 : i32
    %177 = arith.cmpi eq, %arg1, %c1_i32 : i32
    %178 = arith.extui %177 : i1 to i32
    %c0_i32_80 = arith.constant 0 : i32
    %179 = arith.cmpi ne, %178, %c0_i32_80 : i32
    scf.if %179 {
      %c0_81 = arith.constant 0 : index
      %c0_82 = arith.constant 0 : index
      %c0_83 = arith.constant 0 : index
      %180 = vector.load %arg15[%c0_81, %c0_82, %c0_83] : memref<1x8x32xf32, #tpu.memory_space<vmem>>, vector<1x8x32xf32>
      %181 = vector.shape_cast %180 : vector<1x8x32xf32> to vector<8x32xf32>
      %182 = vector.shape_cast %175 : vector<8x32xf32> to vector<1x8x32xf32>
      tpu.vector_store %arg15[%c0_81, %c0_82, %c0_83], %182 {strides = array<i32>} : memref<1x8x32xf32, #tpu.memory_space<vmem>>, vector<1x8x32xf32>,
    } else {
    }
    return
  }
  func.func @transform_0(%arg0: i32, %arg1: i32) -> (i32, i32, i32) {
    %c0_i32 = arith.constant 0 : i32
    %c0_i32_0 = arith.constant 0 : i32
    %c0_i32_1 = arith.constant 0 : i32
    return %arg0, %c0_i32, %c0_i32_0 : i32, i32, i32
  }
  func.func @transform_1(%arg0: i32, %arg1: i32) -> (i32, i32, i32) {
    %c0_i32 = arith.constant 0 : i32
    %c0_i32_0 = arith.constant 0 : i32
    %c0_i32_1 = arith.constant 0 : i32
    return %arg1, %c0_i32, %c0_i32_0 : i32, i32, i32
  }
  func.func @transform_2(%arg0: i32, %arg1: i32) -> (i32, i32, i32) {
    %c0_i32 = arith.constant 0 : i32
    %c0_i32_0 = arith.constant 0 : i32
    %c0_i32_1 = arith.constant 0 : i32
    return %arg1, %c0_i32, %c0_i32_0 : i32, i32, i32
  }
  func.func @transform_3(%arg0: i32, %arg1: i32) -> (i32, i32, i32) {
    %c0_i32 = arith.constant 0 : i32
    %c0_i32_0 = arith.constant 0 : i32
    %c0_i32_1 = arith.constant 0 : i32
    return %arg1, %c0_i32, %c0_i32_0 : i32, i32, i32
  }
  func.func @transform_4(%arg0: i32, %arg1: i32) -> (i32, i32, i32) {
    %c0_i32 = arith.constant 0 : i32
    %c0_i32_0 = arith.constant 0 : i32
    %c0_i32_1 = arith.constant 0 : i32
    return %arg1, %c0_i32, %c0_i32_0 : i32, i32, i32
  }
  func.func @transform_5(%arg0: i32, %arg1: i32) -> (i32, i32, i32) {
    %c0_i32 = arith.constant 0 : i32
    %c0_i32_0 = arith.constant 0 : i32
    %c0_i32_1 = arith.constant 0 : i32
    return %arg1, %c0_i32, %c0_i32_0 : i32, i32, i32
  }
  func.func @transform_6(%arg0: i32, %arg1: i32) -> (i32, i32, i32) {
    %c0_i32 = arith.constant 0 : i32
    %c0_i32_0 = arith.constant 0 : i32
    %c0_i32_1 = arith.constant 0 : i32
    return %arg1, %c0_i32, %c0_i32_0 : i32, i32, i32
  }
  func.func @transform_7(%arg0: i32, %arg1: i32) -> (i32, i32, i32) {
    %c0_i32 = arith.constant 0 : i32
    %c0_i32_0 = arith.constant 0 : i32
    %c0_i32_1 = arith.constant 0 : i32
    return %arg1, %c0_i32, %c0_i32_0 : i32, i32, i32
  }
  func.func @transform_8(%arg0: i32, %arg1: i32) -> (i32, i32, i32) {
    %c0_i32 = arith.constant 0 : i32
    %c0_i32_0 = arith.constant 0 : i32
    %c0_i32_1 = arith.constant 0 : i32
    return %arg1, %c0_i32, %c0_i32_0 : i32, i32, i32
  }
  func.func @transform_9(%arg0: i32, %arg1: i32) -> (i32, i32, i32) {
    %c0_i32 = arith.constant 0 : i32
    %c0_i32_0 = arith.constant 0 : i32
    %c0_i32_1 = arith.constant 0 : i32
    return %arg1, %c0_i32, %c0_i32_0 : i32, i32, i32
  }
  func.func @transform_10(%arg0: i32, %arg1: i32) -> (i32, i32, i32) {
    %c0_i32 = arith.constant 0 : i32
    %c0_i32_0 = arith.constant 0 : i32
    %c0_i32_1 = arith.constant 0 : i32
    return %arg1, %c0_i32, %c0_i32_0 : i32, i32, i32
  }
  func.func @transform_11(%arg0: i32, %arg1: i32) -> (i32, i32, i32) {
    %c0_i32 = arith.constant 0 : i32
    %c0_i32_0 = arith.constant 0 : i32
    %c0_i32_1 = arith.constant 0 : i32
    return %arg1, %c0_i32, %c0_i32_0 : i32, i32, i32
  }
  func.func @transform_12(%arg0: i32, %arg1: i32) -> (i32, i32, i32) {
    %c0_i32 = arith.constant 0 : i32
    %c0_i32_0 = arith.constant 0 : i32
    %c0_i32_1 = arith.constant 0 : i32
    return %arg1, %c0_i32, %c0_i32_0 : i32, i32, i32
  }
  func.func @transform_13(%arg0: i32, %arg1: i32) -> (i32, i32, i32) {
    %c0_i32 = arith.constant 0 : i32
    %c0_i32_0 = arith.constant 0 : i32
    %c0_i32_1 = arith.constant 0 : i32
    return %arg0, %c0_i32, %c0_i32_0 : i32, i32, i32
  }
}

module attributes {stable_mosaic.version = 11 : i64} {
  func.func @_head_kernel(%arg0: i32, %arg1: memref<1x8x32xf32, #tpu.memory_space<vmem>>, %arg2: memref<1x32xf32, #tpu.memory_space<vmem>>, %arg3: memref<1x32xf32, #tpu.memory_space<vmem>>, %arg4: memref<32x128xbf16, #tpu.memory_space<vmem>>, %arg5: memref<1x128xf32, #tpu.memory_space<vmem>>, %arg6: memref<1x1x128xf32, #tpu.memory_space<vmem>>) attributes {dimension_semantics = [#tpu.dimension_semantics<parallel>], iteration_bounds = array<i64: 2>, scalar_prefetch = 0 : i64, scratch_operands = 0 : i64, tpu.core_type = #tpu.core_type<tc>, window_params = [{transform_indices = @transform_0, window_bounds = array<i64: 1, 8, 32>}, {pipeline_mode = #tpu.pipeline_mode<synchronous>, transform_indices = @transform_1, window_bounds = array<i64: 1, 32>}, {pipeline_mode = #tpu.pipeline_mode<synchronous>, transform_indices = @transform_2, window_bounds = array<i64: 1, 32>}, {pipeline_mode = #tpu.pipeline_mode<synchronous>, transform_indices = @transform_3, window_bounds = array<i64: 32, 128>}, {pipeline_mode = #tpu.pipeline_mode<synchronous>, transform_indices = @transform_4, window_bounds = array<i64: 1, 128>}, {transform_indices = @transform_5, window_bounds = array<i64: 1, 1, 128>}]} {
    %c0 = arith.constant 0 : index
    %c0_0 = arith.constant 0 : index
    %c0_1 = arith.constant 0 : index
    %0 = vector.load %arg1[%c0, %c0_0, %c0_1] : memref<1x8x32xf32, #tpu.memory_space<vmem>>, vector<1x8x32xf32>
    %1 = vector.shape_cast %0 : vector<1x8x32xf32> to vector<8x32xf32>
    %cst = arith.constant dense<0.000000e+00> : vector<32xf32>
    %2 = vector.multi_reduction <add>, %1, %cst [0] : vector<8x32xf32> to vector<32xf32>
    %3 = vector.shape_cast %2 : vector<32xf32> to vector<1x32xf32>
    %cst_2 = arith.constant 8.000000e+00 : f32
    %4 = vector.broadcast %cst_2 : f32 to vector<1x32xf32>
    %5 = arith.divf %3, %4 : vector<1x32xf32>
    %c0_3 = arith.constant 0 : index
    %c0_4 = arith.constant 0 : index
    %6 = vector.load %arg2[%c0_3, %c0_4] : memref<1x32xf32, #tpu.memory_space<vmem>>, vector<1x32xf32>
    %c0_5 = arith.constant 0 : index
    %c0_6 = arith.constant 0 : index
    %7 = vector.load %arg3[%c0_5, %c0_6] : memref<1x32xf32, #tpu.memory_space<vmem>>, vector<1x32xf32>
    %cst_7 = arith.constant dense<0.000000e+00> : vector<1xf32>
    %8 = vector.multi_reduction <add>, %5, %cst_7 [1] : vector<1x32xf32> to vector<1xf32>
    %9 = vector.shape_cast %8 : vector<1xf32> to vector<1x1xf32>
    %cst_8 = arith.constant 3.200000e+01 : f32
    %10 = vector.broadcast %cst_8 : f32 to vector<1x1xf32>
    %11 = arith.divf %9, %10 : vector<1x1xf32>
    %12 = vector.broadcast %11 : vector<1x1xf32> to vector<1x32xf32>
    %13 = arith.subf %5, %12 : vector<1x32xf32>
    %14 = arith.mulf %13, %13 : vector<1x32xf32>
    %cst_9 = arith.constant dense<0.000000e+00> : vector<1xf32>
    %15 = vector.multi_reduction <add>, %14, %cst_9 [1] : vector<1x32xf32> to vector<1xf32>
    %16 = vector.shape_cast %15 : vector<1xf32> to vector<1x1xf32>
    %cst_10 = arith.constant 3.200000e+01 : f32
    %17 = vector.broadcast %cst_10 : f32 to vector<1x1xf32>
    %18 = arith.divf %16, %17 : vector<1x1xf32>
    %19 = vector.broadcast %11 : vector<1x1xf32> to vector<1x32xf32>
    %20 = arith.subf %5, %19 : vector<1x32xf32>
    %cst_11 = arith.constant 9.99999974E-6 : f32
    %21 = vector.broadcast %cst_11 : f32 to vector<1x1xf32>
    %22 = arith.addf %18, %21 : vector<1x1xf32>
    %23 = math.rsqrt %22 : vector<1x1xf32>
    %24 = vector.broadcast %23 : vector<1x1xf32> to vector<1x32xf32>
    %25 = arith.mulf %20, %24 : vector<1x32xf32>
    %26 = arith.mulf %25, %6 : vector<1x32xf32>
    %27 = arith.addf %26, %7 : vector<1x32xf32>
    %28 = arith.truncf %27 : vector<1x32xf32> to vector<1x32xbf16>
    %c0_12 = arith.constant 0 : index
    %c0_13 = arith.constant 0 : index
    %29 = vector.load %arg4[%c0_12, %c0_13] : memref<32x128xbf16, #tpu.memory_space<vmem>>, vector<32x128xbf16>
    %cst_14 = arith.constant dense<0.000000e+00> : vector<1x128xf32>
    %30 = tpu.matmul %28, %29, %cst_14 {dimension_numbers = #tpu.dot_dimension_numbers<[1], [0], [0], [1], [0, 0, 1, 1], [], []>} : vector<1x32xbf16>, vector<32x128xbf16>, vector<1x128xf32> -> vector<1x128xf32>
    %c0_15 = arith.constant 0 : index
    %c0_16 = arith.constant 0 : index
    %31 = vector.load %arg5[%c0_15, %c0_16] : memref<1x128xf32, #tpu.memory_space<vmem>>, vector<1x128xf32>
    %32 = arith.addf %30, %31 : vector<1x128xf32>
    %c0_17 = arith.constant 0 : index
    %c0_18 = arith.constant 0 : index
    %c0_19 = arith.constant 0 : index
    %33 = vector.load %arg6[%c0_17, %c0_18, %c0_19] : memref<1x1x128xf32, #tpu.memory_space<vmem>>, vector<1x1x128xf32>
    %34 = vector.shape_cast %33 : vector<1x1x128xf32> to vector<1x128xf32>
    %35 = vector.shape_cast %32 : vector<1x128xf32> to vector<1x1x128xf32>
    tpu.vector_store %arg6[%c0_17, %c0_18, %c0_19], %35 {strides = array<i32>} : memref<1x1x128xf32, #tpu.memory_space<vmem>>, vector<1x1x128xf32>,
    return
  }
  func.func @transform_0(%arg0: i32) -> (i32, i32, i32) {
    %c0_i32 = arith.constant 0 : i32
    %c0_i32_0 = arith.constant 0 : i32
    %c0_i32_1 = arith.constant 0 : i32
    return %arg0, %c0_i32, %c0_i32_0 : i32, i32, i32
  }
  func.func @transform_1(%arg0: i32) -> (i32, i32) {
    %c0_i32 = arith.constant 0 : i32
    %c0_i32_0 = arith.constant 0 : i32
    %c0_i32_1 = arith.constant 0 : i32
    return %c0_i32, %c0_i32_0 : i32, i32
  }
  func.func @transform_2(%arg0: i32) -> (i32, i32) {
    %c0_i32 = arith.constant 0 : i32
    %c0_i32_0 = arith.constant 0 : i32
    %c0_i32_1 = arith.constant 0 : i32
    return %c0_i32, %c0_i32_0 : i32, i32
  }
  func.func @transform_3(%arg0: i32) -> (i32, i32) {
    %c0_i32 = arith.constant 0 : i32
    %c0_i32_0 = arith.constant 0 : i32
    %c0_i32_1 = arith.constant 0 : i32
    return %c0_i32, %c0_i32_0 : i32, i32
  }
  func.func @transform_4(%arg0: i32) -> (i32, i32) {
    %c0_i32 = arith.constant 0 : i32
    %c0_i32_0 = arith.constant 0 : i32
    %c0_i32_1 = arith.constant 0 : i32
    return %c0_i32, %c0_i32_0 : i32, i32
  }
  func.func @transform_5(%arg0: i32) -> (i32, i32, i32) {
    %c0_i32 = arith.constant 0 : i32
    %c0_i32_0 = arith.constant 0 : i32
    %c0_i32_1 = arith.constant 0 : i32
    return %arg0, %c0_i32, %c0_i32_0 : i32, i32, i32
  }
}

</mosaic_0001>

<llo_original>
// kernel: vit_forward.3
$region0: #{vit_forward.3}
  #allocation0 [shape = 'u32[]', space=smem, size = 0x4, offset = 0x4, fixed_abs, tag = 'smem constant byte address 0x4 - core index']
  #allocation1 [shape = 'u32[72,128]{1,0:T(1,128)}', space=vmem, size = 0x9000, scoped, tag = 'internal scratch']
  %s0 = inlined_call_operand.vmem [shape: bf16[2,8,384], index: 0, kind: input, shape index: {}]
  %s1 = inlined_call_operand.vmem [shape: bf16[384,32], index: 1, kind: input, shape index: {}]
  %s2 = inlined_call_operand.vmem [shape: f32[1,32], index: 2, kind: input, shape index: {}]
  %s3 = inlined_call_operand.vmem [shape: f32[8,32], index: 3, kind: input, shape index: {}]
  %s4 = inlined_call_operand.vmem [shape: f32[2,8,32], index: 4, kind: output, shape index: {}]
  %s5 = sld [smem:[#allocation0]]
  $region49: #{vit_forward.3} parent=0
    _
  %s7 = ssub.s32 1, %s5
  %s8 = scalar_select 0, %s7, %s5
  loop: start=0, step=1, limit=4
  $region2: #{vit_forward.3} parent=0 // loop_pre_header
    _
  $region3: #{vit_forward.3} parent=0 // loop_header
    %s10 = sphi 0, %s14
    %p11 = scmp.ge.s32.totalorder %s10, 4
    %s20 = sphi 0, %s22
    %s23 = sphi 0, %s20
    %s24 = sphi 0, %s23
    %s40 = sphi 0, %s24
    %s44 = sphi 0, %s44
    %s46 = sphi 0, %s44
    %s47 = sphi 0, %s46
    %s61 = sphi 0, %s47
    %s65 = sphi 0, %s65
    %s67 = sphi 0, %s65
    %s68 = sphi 0, %s67
    %s82 = sphi 0, %s68
    %s86 = sphi 0, %s86
    %s88 = sphi 0, %s86
    %s89 = sphi 0, %s88
    %s103 = sphi 0, %s89
    %s109 = sphi 0, %s111
    %s112 = sphi 0, %s109
    %s113 = sphi 0, %s112
    %s129 = sphi 0, %s113
  $region4: #{vit_forward.3} parent=0 // loop_header_branch
    %13 = sbr.rel (%p11) target = $region8
  $region5: #{vit_forward.3} parent=0 // loop_body
    %s15 = ssub.s32 %s10, 1
    %s16 = ssub.s32 %s10, 2
    %s17 = sadd.s32 %s10, 1
    %s18 = ssub.s32 %s10, %s17
    %p19 = scmp.eq.s32.totalorder %s18, 0
    %s21 = sadd.s32 %s20, 1
    %s22 = scalar_select %p19, %s20, %s21
    %p25 = pneg %p19
    %p26 = scmp.eq.s32.totalorder %s10, 1
    %p27 = por %p25, %p26
    %p28 = scmp.ne.s32.totalorder %s20, %s23
    %p29 = scmp.eq.s32.totalorder %s10, 0
    %p30 = por %p28, %p29
    %p31 = scmp.ne.s32.totalorder %s20, %s23
    %p32 = scmp.eq.s32.totalorder %s15, 1
    %p33 = por %p31, %p32
    %p34 = scmp.ne.s32.totalorder %s23, %s24
    %p35 = scmp.eq.s32.totalorder %s15, 0
    %p36 = por %p34, %p35
    %p37 = scmp.ne.s32.totalorder %s23, %s24
    %p38 = scmp.eq.s32.totalorder %s16, 1
    %p39 = por %p37, %p38
    %p41 = scmp.ne.s32.totalorder %s24, %s40
    %p42 = scmp.eq.s32.totalorder %s16, 0
    %p43 = por %p41, %p42
    %s45 = sadd.s32 %s44, 1
    %p48 = scmp.eq.s32.totalorder %s10, 1
    %p49 = scmp.ne.s32.totalorder %s44, %s46
    %p50 = scmp.eq.s32.totalorder %s10, 0
    %p51 = por %p49, %p50
    %p52 = scmp.ne.s32.totalorder %s44, %s46
    %p53 = scmp.eq.s32.totalorder %s15, 1
    %p54 = por %p52, %p53
    %p55 = scmp.ne.s32.totalorder %s46, %s47
    %p56 = scmp.eq.s32.totalorder %s15, 0
    %p57 = por %p55, %p56
    %p58 = scmp.ne.s32.totalorder %s46, %s47
    %p59 = scmp.eq.s32.totalorder %s16, 1
    %p60 = por %p58, %p59
    %p62 = scmp.ne.s32.totalorder %s47, %s61
    %p63 = scmp.eq.s32.totalorder %s16, 0
    %p64 = por %p62, %p63
    %s66 = sadd.s32 %s65, 1
    %p69 = scmp.eq.s32.totalorder %s10, 1
    %p70 = scmp.ne.s32.totalorder %s65, %s67
    %p71 = scmp.eq.s32.totalorder %s10, 0
    %p72 = por %p70, %p71
    %p73 = scmp.ne.s32.totalorder %s65, %s67
    %p74 = scmp.eq.s32.totalorder %s15, 1
    %p75 = por %p73, %p74
    %p76 = scmp.ne.s32.totalorder %s67, %s68
    %p77 = scmp.eq.s32.totalorder %s15, 0
    %p78 = por %p76, %p77
    %p79 = scmp.ne.s32.totalorder %s67, %s68
    %p80 = scmp.eq.s32.totalorder %s16, 1
    %p81 = por %p79, %p80
    %p83 = scmp.ne.s32.totalorder %s68, %s82
    %p84 = scmp.eq.s32.totalorder %s16, 0
    %p85 = por %p83, %p84
    %s87 = sadd.s32 %s86, 1
    %p90 = scmp.eq.s32.totalorder %s10, 1
    %p91 = scmp.ne.s32.totalorder %s86, %s88
    %p92 = scmp.eq.s32.totalorder %s10, 0
    %p93 = por %p91, %p92
    %p94 = scmp.ne.s32.totalorder %s86, %s88
    %p95 = scmp.eq.s32.totalorder %s15, 1
    %p96 = por %p94, %p95
    %p97 = scmp.ne.s32.totalorder %s88, %s89
    %p98 = scmp.eq.s32.totalorder %s15, 0
    %p99 = por %p97, %p98
    %p100 = scmp.ne.s32.totalorder %s88, %s89
    %p101 = scmp.eq.s32.totalorder %s16, 1
    %p102 = por %p100, %p101
    %p104 = scmp.ne.s32.totalorder %s89, %s103
    %p105 = scmp.eq.s32.totalorder %s16, 0
    %p106 = por %p104, %p105
    %s107 = ssub.s32 %s10, %s17
    %p108 = scmp.eq.s32.totalorder %s107, 0
    %s110 = sadd.s32 %s109, 1
    %s111 = scalar_select %p108, %s109, %s110
    %p114 = pneg %p108
    %p115 = scmp.eq.s32.totalorder %s10, 1
    %p116 = por %p114, %p115
    %p117 = scmp.ne.s32.totalorder %s109, %s112
    %p118 = scmp.eq.s32.totalorder %s10, 0
    %p119 = por %p117, %p118
    %p120 = scmp.ne.s32.totalorder %s109, %s112
    %p121 = scmp.eq.s32.totalorder %s15, 1
    %p122 = por %p120, %p121
    %p123 = scmp.ne.s32.totalorder %s112, %s113
    %p124 = scmp.eq.s32.totalorder %s15, 0
    %p125 = por %p123, %p124
    %p126 = scmp.ne.s32.totalorder %s112, %s113
    %p127 = scmp.eq.s32.totalorder %s16, 1
    %p128 = por %p126, %p127
    %p130 = scmp.ne.s32.totalorder %s113, %s129
    %p131 = scmp.eq.s32.totalorder %s16, 0
    %p132 = por %p130, %p131
    %p133 = scmp.le.s32.totalorder 1, %s10
    %p134 = scmp.lt.s32.totalorder %s10, 3
    %p135 = pnand %p133, %p134
    %p136 = pneg %p135
    // Predicated region
    $region9: #{vit_forward.3} parent=5 // pred_check
      _
    $region10: #{vit_forward.3} parent=5 // pred_check_branch
      %138 = sbr.rel (%p135) target = $region12
    $region11: #{vit_forward.3} parent=5 // pred_region
      %s139 = ssub.s32 %s10, 1
      // Predicated region
      $region13: #{vit_forward.3} parent=11 // pred_check
        %p140 = pneg %p57
      $region14: #{vit_forward.3} parent=11 // pred_check_branch
        %142 = sbr.rel (%p140) target = $region16
      $region15: #{vit_forward.3} parent=11 // pred_region
        _
      $region16: #{vit_forward.3} parent=11 // pred_fallthru
        _
      // Predicated region
      $region17: #{vit_forward.3} parent=11 // pred_check
        %p143 = pneg %p78
      $region18: #{vit_forward.3} parent=11 // pred_check_branch
        %145 = sbr.rel (%p143) target = $region20
      $region19: #{vit_forward.3} parent=11 // pred_region
        _
      $region20: #{vit_forward.3} parent=11 // pred_fallthru
        _
      // Predicated region
      $region21: #{vit_forward.3} parent=11 // pred_check
        %p146 = pneg %p99
      $region22: #{vit_forward.3} parent=11 // pred_check_branch
        %148 = sbr.rel (%p146) target = $region24
      $region23: #{vit_forward.3} parent=11 // pred_region
        _
      $region24: #{vit_forward.3} parent=11 // pred_fallthru
        _
    $region12: #{vit_forward.3} parent=5 // pred_fallthru
      _
    %p149 = scmp.lt.s32.totalorder %s10, 2
    // Predicated region
    $region25: #{vit_forward.3} parent=5 // pred_check
      %p150 = pneg %p149
    $region26: #{vit_forward.3} parent=5 // pred_check_branch
      %152 = sbr.rel (%p150) target = $region28
    $region27: #{vit_forward.3} parent=5 // pred_region
      // Predicated region
      $region29: #{vit_forward.3} parent=27 // pred_check
        %p153 = pneg %p30
      $region30: #{vit_forward.3} parent=27 // pred_check_branch
        %155 = sbr.rel (%p153) target = $region32
      $region31: #{vit_forward.3} parent=27 // pred_region
        %p156 = scmp.lt.s32.totalorder %s10, 1
        %s157 = scalar_select %p156, %s10, 1
        %s158 = smul.addr %s157, 3
        %s159 = smul.addr %s158, 4
        %s160 = scalar_lea.vmem %s0, %s159
      $region32: #{vit_forward.3} parent=27 // pred_fallthru
        _
    $region28: #{vit_forward.3} parent=5 // pred_fallthru
      _
    %p161 = scmp.le.s32.totalorder 1, %s10
    %p162 = scmp.lt.s32.totalorder %s10, 3
    %p163 = pnand %p161, %p162
    %p164 = pneg %p163
    // Predicated region
    $region33: #{vit_forward.3} parent=5 // pred_check
      _
    $region34: #{vit_forward.3} parent=5 // pred_check_branch
      %166 = sbr.rel (%p163) target = $region36
    $region35: #{vit_forward.3} parent=5 // pred_region
      %s167 = ssub.s32 %s10, 1
      %p168 = scmp.lt.s32.totalorder %s15, 1
      %s169 = scalar_select %p168, %s15, 1
      %s170 = smul.addr %s169, 3
      %s171 = smul.addr %s170, 4
      %s172 = scalar_lea.vmem %s0, %s171
      %p173 = pneg %p36
      %p174 = pneg %p33
      %p175 = pneg %p57
      %p176 = pneg %p54
      %p177 = pneg %p78
      %p178 = pneg %p75
      %p179 = pneg %p99
      %p180 = pneg %p96
      %p181 = pneg %p125
      %p182 = pneg %p122
      %p183 = scmp.lt.s32.totalorder %s15, 1
      %s184 = scalar_select %p183, %s15, 1
      %s185 = smul.addr %s184, 8
      %s186 = scalar_lea.vmem %s4, %s185
      %p187 = scmp.lt.s32.totalorder %s15, 1
      %s188 = scalar_select %p187, %s15, 1
      %s189 = smul.addr %s188, 3
      %s190 = smul.addr %s189, 4
      %s191 = scalar_lea.vmem %s0, %s190
      %p192 = scmp.lt.s32.totalorder %s15, 1
      %s193 = scalar_select %p192, %s15, 1
      %s194 = smul.addr %s193, 8
      %s195 = scalar_lea.vmem %s4, %s194
      %v196 = vld [vmem:[%s191] sm:$0xff]
      %v197 = vld [vmem:[%s191 + $0x8] sm:$0xf]
      %v198 = vld [vmem:[%s1] sm:$0xf]
      %v199 = vld [vmem:[%s1 + $0x4] sm:$0xf]
      %v200 = vld [vmem:[%s1 + $0x8] sm:$0xf]
      %v201 = vld [vmem:[%s1 + $0xc] sm:$0xf]
      %v202 = vld [vmem:[%s1 + $0x10] sm:$0xf]
      %v203 = vld [vmem:[%s1 + $0x14] sm:$0xf]
      %v204 = vld [vmem:[%s1 + $0x18] sm:$0xf]
      %v205 = vld [vmem:[%s1 + $0x1c] sm:$0xf]
      %v206 = vld [vmem:[%s1 + $0x20] sm:$0xf]
      %v207 = vld [vmem:[%s1 + $0x24] sm:$0xf]
      %v208 = vld [vmem:[%s1 + $0x28] sm:$0xf]
      %v209 = vld [vmem:[%s1 + $0x2c] sm:$0xf]
      %v210 = vld [vmem:[%s1 + $0x30] sm:$0xf]
      %v211 = vld [vmem:[%s1 + $0x34] sm:$0xf]
      %v212 = vld [vmem:[%s1 + $0x38] sm:$0xf]
      %v213 = vld [vmem:[%s1 + $0x3c] sm:$0xf]
      %v214 = vld [vmem:[%s1 + $0x40] sm:$0xf]
      %v215 = vld [vmem:[%s1 + $0x44] sm:$0xf]
      %v216 = vld [vmem:[%s1 + $0x48] sm:$0xf]
      %v217 = vld [vmem:[%s1 + $0x4c] sm:$0xf]
      %v218 = vld [vmem:[%s1 + $0x50] sm:$0xf]
      %v219 = vld [vmem:[%s1 + $0x54] sm:$0xf]
      %v220 = vld [vmem:[%s1 + $0x58] sm:$0xf]
      %v221 = vld [vmem:[%s1 + $0x5c] sm:$0xf]
      %v222 = vld [vmem:[%s1 + $0x60] sm:$0xf]
      %v223 = vld [vmem:[%s1 + $0x64] sm:$0xf]
      %v224 = vld [vmem:[%s1 + $0x68] sm:$0xf]
      %v225 = vld [vmem:[%s1 + $0x6c] sm:$0xf]
      %v226 = vld [vmem:[%s1 + $0x70] sm:$0xf]
      %v227 = vld [vmem:[%s1 + $0x74] sm:$0xf]
      %v228 = vld [vmem:[%s1 + $0x78] sm:$0xf]
      %v229 = vld [vmem:[%s1 + $0x7c] sm:$0xf]
      %v230 = vld [vmem:[%s1 + $0x80] sm:$0xf]
      %v231 = vld [vmem:[%s1 + $0x84] sm:$0xf]
      %v232 = vld [vmem:[%s1 + $0x88] sm:$0xf]
      %v233 = vld [vmem:[%s1 + $0x8c] sm:$0xf]
      %v234 = vld [vmem:[%s1 + $0x90] sm:$0xf]
      %v235 = vld [vmem:[%s1 + $0x94] sm:$0xf]
      %v236 = vld [vmem:[%s1 + $0x98] sm:$0xf]
      %v237 = vld [vmem:[%s1 + $0x9c] sm:$0xf]
      %v238 = vld [vmem:[%s1 + $0xa0] sm:$0xf]
      %v239 = vld [vmem:[%s1 + $0xa4] sm:$0xf]
      %v240 = vld [vmem:[%s1 + $0xa8] sm:$0xf]
      %v241 = vld [vmem:[%s1 + $0xac] sm:$0xf]
      %v242 = vld [vmem:[%s1 + $0xb0] sm:$0xf]
      %v243 = vld [vmem:[%s1 + $0xb4] sm:$0xf]
      %v244 = vld [vmem:[%s1 + $0xb8] sm:$0xf]
      %v245 = vld [vmem:[%s1 + $0xbc] sm:$0xf]
      %v246 = vld [vmem:[%s2] sm:$0x1]
      %v248 = vperm.slane %v246, 0
      %v252 = vunpack.c.l.b16 %v196
      %v253 = vunpack.c.h.b16 %v196
      %v254 = vunpack.c.l.b16 %v197
      %v255 = vpack.c.b16 %v252, %v252
      %v256 = vpack.c.b16 %v253, %v253
      %v257 = vpack.c.b16 %v254, %v254
      %v309 = vunpack.c.l.b16 %v198
      %v310 = vunpack.c.l.b16 %v199
      %v311 = vunpack.c.l.b16 %v200
      %v312 = vunpack.c.l.b16 %v201
      %v313 = vunpack.c.l.b16 %v202
      %v314 = vunpack.c.l.b16 %v203
      %v315 = vunpack.c.l.b16 %v204
      %v316 = vunpack.c.l.b16 %v205
      %v317 = vunpack.c.l.b16 %v206
      %v318 = vunpack.c.l.b16 %v207
      %v319 = vunpack.c.l.b16 %v208
      %v320 = vunpack.c.l.b16 %v209
      %v321 = vunpack.c.l.b16 %v210
      %v322 = vunpack.c.l.b16 %v211
      %v323 = vunpack.c.l.b16 %v212
      %v324 = vunpack.c.l.b16 %v213
      %v325 = vunpack.c.l.b16 %v214
      %v326 = vunpack.c.l.b16 %v215
      %v327 = vunpack.c.l.b16 %v216
      %v328 = vunpack.c.l.b16 %v217
      %v329 = vunpack.c.l.b16 %v218
      %v330 = vunpack.c.l.b16 %v219
      %v331 = vunpack.c.l.b16 %v220
      %v332 = vunpack.c.l.b16 %v221
      %v333 = vunpack.c.l.b16 %v222
      %v334 = vunpack.c.l.b16 %v223
      %v335 = vunpack.c.l.b16 %v224
      %v336 = vunpack.c.l.b16 %v225
      %v337 = vunpack.c.l.b16 %v226
      %v338 = vunpack.c.l.b16 %v227
      %v339 = vunpack.c.l.b16 %v228
      %v340 = vunpack.c.l.b16 %v229
      %v341 = vunpack.c.l.b16 %v230
      %v342 = vunpack.c.l.b16 %v231
      %v343 = vunpack.c.l.b16 %v232
      %v344 = vunpack.c.l.b16 %v233
      %v345 = vunpack.c.l.b16 %v234
      %v346 = vunpack.c.l.b16 %v235
      %v347 = vunpack.c.l.b16 %v236
      %v348 = vunpack.c.l.b16 %v237
      %v349 = vunpack.c.l.b16 %v238
      %v350 = vunpack.c.l.b16 %v239
      %v351 = vunpack.c.l.b16 %v240
      %v352 = vunpack.c.l.b16 %v241
      %v353 = vunpack.c.l.b16 %v242
      %v354 = vunpack.c.l.b16 %v243
      %v355 = vunpack.c.l.b16 %v244
      %v356 = vunpack.c.l.b16 %v245
      %v357 = vpack.c.b16 %v310, %v309
      %v358 = vpack.c.b16 %v312, %v311
      %v359 = vpack.c.b16 %v314, %v313
      %v360 = vpack.c.b16 %v316, %v315
      %v361 = vpack.c.b16 %v318, %v317
      %v362 = vpack.c.b16 %v320, %v319
      %v363 = vpack.c.b16 %v322, %v321
      %v364 = vpack.c.b16 %v324, %v323
      %v365 = vpack.c.b16 %v326, %v325
      %v366 = vpack.c.b16 %v328, %v327
      %v367 = vpack.c.b16 %v330, %v329
      %v368 = vpack.c.b16 %v332, %v331
      %v369 = vpack.c.b16 %v334, %v333
      %v370 = vpack.c.b16 %v336, %v335
      %v371 = vpack.c.b16 %v338, %v337
      %v372 = vpack.c.b16 %v340, %v339
      %v373 = vpack.c.b16 %v342, %v341
      %v374 = vpack.c.b16 %v344, %v343
      %v375 = vpack.c.b16 %v346, %v345
      %v376 = vpack.c.b16 %v348, %v347
      %v377 = vpack.c.b16 %v350, %v349
      %v378 = vpack.c.b16 %v352, %v351
      %v379 = vpack.c.b16 %v354, %v353
      %v380 = vpack.c.b16 %v356, %v355
      %405 = vmatpush.bf16.msra.mxu0 %v364
      %406 = vmatpush.bf16.msra.mxu0 %v363
      %407 = vmatpush.bf16.msra.mxu0 %v362
      %408 = vmatpush.bf16.msra.mxu0 %v361
      %409 = vmatpush.bf16.msra.mxu0 %v360
      %410 = vmatpush.bf16.msra.mxu0 %v359
      %411 = vmatpush.bf16.msra.mxu0 %v358
      %412 = vmatpush.bf16.msra.mxu0 %v357
      %413 = vmatmul.bf16.gmra.mxu0 %v255
      %v414 = vpop.f32.mrf.mxu0
      %v415 = vadd.f32 %v248, %v414
      %v416 = vpop.f32.mrf.mxu0
      %417 = vdwg.mxu0
      %418 = vmatpush.bf16.msra.mxu0 %v372
      %419 = vmatpush.bf16.msra.mxu0 %v371
      %420 = vmatpush.bf16.msra.mxu0 %v370
      %421 = vmatpush.bf16.msra.mxu0 %v369
      %422 = vmatpush.bf16.msra.mxu0 %v368
      %423 = vmatpush.bf16.msra.mxu0 %v367
      %424 = vmatpush.bf16.msra.mxu0 %v366
      %425 = vmatpush.bf16.msra.mxu0 %v365
      %426 = vmatmul.bf16.gmra.mxu0 %v256
      %v427 = vpop.f32.mrf.mxu0
      %v428 = vadd.f32 %v415, %v427
      %v429 = vpop.f32.mrf.mxu0
      %430 = vdwg.mxu0
      %431 = vmatpush.bf16.msra.mxu0 %v380
      %432 = vmatpush.bf16.msra.mxu0 %v379
      %433 = vmatpush.bf16.msra.mxu0 %v378
      %434 = vmatpush.bf16.msra.mxu0 %v377
      %435 = vmatpush.bf16.msra.mxu0 %v376
      %436 = vmatpush.bf16.msra.mxu0 %v375
      %437 = vmatpush.bf16.msra.mxu0 %v374
      %438 = vmatpush.bf16.msra.mxu0 %v373
      %439 = vmatmul.bf16.gmra.mxu0 %v257
      %v440 = vpop.f32.mrf.mxu0
      %v441 = vadd.f32 %v428, %v440
      %v442 = vpop.f32.mrf.mxu0
      %443 = vdwg.mxu0
      %v444 = vld [vmem:[%s3] sm:$0xff]
      %v445 = vadd.f32 %v441, %v444
      %vm446 = vcmask 261120
      %447 = vst.msk [vmem:[%s195] sm:$0xff] %vm446, %v445
      %p448 = scmp.lt.s32.totalorder %s15, 1
      %s449 = scalar_select %p448, %s15, 1
      %s450 = smul.addr %s449, 8
      %s451 = scalar_lea.vmem %s4, %s450
      // Predicated region
      $region37: #{vit_forward.3} parent=35 // pred_check
        %p452 = pneg %p122
      $region38: #{vit_forward.3} parent=35 // pred_check_branch
        %454 = sbr.rel (%p452) target = $region40
      $region39: #{vit_forward.3} parent=35 // pred_region
        _
      $region40: #{vit_forward.3} parent=35 // pred_fallthru
        _
    $region36: #{vit_forward.3} parent=5 // pred_fallthru
      _
    %p455 = scmp.le.s32.totalorder 2, %s10
    // Predicated region
    $region41: #{vit_forward.3} parent=5 // pred_check
      %p456 = pneg %p455
    $region42: #{vit_forward.3} parent=5 // pred_check_branch
      %458 = sbr.rel (%p456) target = $region44
    $region43: #{vit_forward.3} parent=5 // pred_region
      %s459 = ssub.s32 %s10, 2
      // Predicated region
      $region45: #{vit_forward.3} parent=43 // pred_check
        %p460 = pneg %p128
      $region46: #{vit_forward.3} parent=43 // pred_check_branch
        %462 = sbr.rel (%p460) target = $region48
      $region47: #{vit_forward.3} parent=43 // pred_region
        %p463 = scmp.lt.s32.totalorder %s16, 1
        %s464 = scalar_select %p463, %s16, 1
        %s465 = smul.addr %s464, 8
        %s466 = scalar_lea.vmem %s4, %s465
      $region48: #{vit_forward.3} parent=43 // pred_fallthru
        _
    $region44: #{vit_forward.3} parent=5 // pred_fallthru
      _
  $region6: #{vit_forward.3} parent=0 // loop_footer
    %s14 = sadd.s32 1, %s10
  $region7: #{vit_forward.3} parent=0 // loop_footer_branch
    %9 = sbr.rel target = $region3
  $region8: #{vit_forward.3} parent=0 // loop_exit
    _

// kernel: vit_forward.5
$region0: #{vit_forward.5}
  #allocation0 [shape = 'u32[]', space=smem, size = 0x4, offset = 0x4, fixed_abs, tag = 'smem constant byte address 0x4 - core index']
  #allocation1 [shape = 'u32[72,128]{1,0:T(1,128)}', space=vmem, size = 0x9000, scoped, tag = 'internal scratch']
  %s0 = inlined_call_operand.vmem [shape: f32[2,8,32], index: 0, kind: input, shape index: {}]
  %s1 = inlined_call_operand.vmem [shape: f32[1,32], index: 1, kind: input, shape index: {}]
  %s2 = inlined_call_operand.vmem [shape: f32[1,32], index: 2, kind: input, shape index: {}]
  %s3 = inlined_call_operand.vmem [shape: bf16[32,128], index: 3, kind: input, shape index: {}]
  %s4 = inlined_call_operand.vmem [shape: f32[1,128], index: 4, kind: input, shape index: {}]
  %s5 = inlined_call_operand.hbm [shape: f32[2,1,128], index: 5, kind: output, shape index: {}]
  %s6 = sld [smem:[#allocation0]]
  $region53: #{vit_forward.5} parent=0
    _
  %s8 = ssub.s32 1, %s6
  %s9 = scalar_select 0, %s8, %s6
  $region1: #{vit_forward.5} parent=0
    #allocation2 [shape = 'u8[1024]{0}', space=vmem, size = 0x400, scoped, tag = 'output window, operand 0']
    #allocation3 [shape = 's32[2]{0}', space=sflag, size = 0x8, scoped, tag = 'scoped memory for vit_forward.5']
    %10 = vsyncpa [#allocation3], 0
    %s11 = scalar_lea.sflag [#allocation3], 1
    %12 = vsyncpa %s11, 0
    loop: start=0, step=1, limit=4
    $region2: #{vit_forward.5} parent=1 // loop_pre_header
      _
    $region3: #{vit_forward.5} parent=1 // loop_header
      %s14 = sphi 0, %s18
      %p15 = scmp.ge.s32.totalorder %s14, 4
      %s24 = sphi 0, %s26
      %s27 = sphi 0, %s24
      %s28 = sphi 0, %s27
      %s44 = sphi 0, %s28
      %s48 = sphi 0, %s48
      %s50 = sphi 0, %s48
      %s51 = sphi 0, %s50
      %s65 = sphi 0, %s51
      %s69 = sphi 0, %s69
      %s71 = sphi 0, %s69
      %s72 = sphi 0, %s71
      %s86 = sphi 0, %s72
      %s90 = sphi 0, %s90
      %s92 = sphi 0, %s90
      %s93 = sphi 0, %s92
      %s107 = sphi 0, %s93
      %s111 = sphi 0, %s111
      %s113 = sphi 0, %s111
      %s114 = sphi 0, %s113
      %s128 = sphi 0, %s114
      %s134 = sphi 0, %s136
      %s137 = sphi 0, %s134
      %s138 = sphi 0, %s137
      %s154 = sphi 0, %s138
    $region4: #{vit_forward.5} parent=1 // loop_header_branch
      %17 = sbr.rel (%p15) target = $region8
    $region5: #{vit_forward.5} parent=1 // loop_body
      %s19 = ssub.s32 %s14, 1
      %s20 = ssub.s32 %s14, 2
      %s21 = sadd.s32 %s14, 1
      %s22 = ssub.s32 %s14, %s21
      %p23 = scmp.eq.s32.totalorder %s22, 0
      %s25 = sadd.s32 %s24, 1
      %s26 = scalar_select %p23, %s24, %s25
      %p29 = pneg %p23
      %p30 = scmp.eq.s32.totalorder %s14, 1
      %p31 = por %p29, %p30
      %p32 = scmp.ne.s32.totalorder %s24, %s27
      %p33 = scmp.eq.s32.totalorder %s14, 0
      %p34 = por %p32, %p33
      %p35 = scmp.ne.s32.totalorder %s24, %s27
      %p36 = scmp.eq.s32.totalorder %s19, 1
      %p37 = por %p35, %p36
      %p38 = scmp.ne.s32.totalorder %s27, %s28
      %p39 = scmp.eq.s32.totalorder %s19, 0
      %p40 = por %p38, %p39
      %p41 = scmp.ne.s32.totalorder %s27, %s28
      %p42 = scmp.eq.s32.totalorder %s20, 1
      %p43 = por %p41, %p42
      %p45 = scmp.ne.s32.totalorder %s28, %s44
      %p46 = scmp.eq.s32.totalorder %s20, 0
      %p47 = por %p45, %p46
      %s49 = sadd.s32 %s48, 1
      %p52 = scmp.eq.s32.totalorder %s14, 1
      %p53 = scmp.ne.s32.totalorder %s48, %s50
      %p54 = scmp.eq.s32.totalorder %s14, 0
      %p55 = por %p53, %p54
      %p56 = scmp.ne.s32.totalorder %s48, %s50
      %p57 = scmp.eq.s32.totalorder %s19, 1
      %p58 = por %p56, %p57
      %p59 = scmp.ne.s32.totalorder %s50, %s51
      %p60 = scmp.eq.s32.totalorder %s19, 0
      %p61 = por %p59, %p60
      %p62 = scmp.ne.s32.totalorder %s50, %s51
      %p63 = scmp.eq.s32.totalorder %s20, 1
      %p64 = por %p62, %p63
      %p66 = scmp.ne.s32.totalorder %s51, %s65
      %p67 = scmp.eq.s32.totalorder %s20, 0
      %p68 = por %p66, %p67
      %s70 = sadd.s32 %s69, 1
      %p73 = scmp.eq.s32.totalorder %s14, 1
      %p74 = scmp.ne.s32.totalorder %s69, %s71
      %p75 = scmp.eq.s32.totalorder %s14, 0
      %p76 = por %p74, %p75
      %p77 = scmp.ne.s32.totalorder %s69, %s71
      %p78 = scmp.eq.s32.totalorder %s19, 1
      %p79 = por %p77, %p78
      %p80 = scmp.ne.s32.totalorder %s71, %s72
      %p81 = scmp.eq.s32.totalorder %s19, 0
      %p82 = por %p80, %p81
      %p83 = scmp.ne.s32.totalorder %s71, %s72
      %p84 = scmp.eq.s32.totalorder %s20, 1
      %p85 = por %p83, %p84
      %p87 = scmp.ne.s32.totalorder %s72, %s86
      %p88 = scmp.eq.s32.totalorder %s20, 0
      %p89 = por %p87, %p88
      %s91 = sadd.s32 %s90, 1
      %p94 = scmp.eq.s32.totalorder %s14, 1
      %p95 = scmp.ne.s32.totalorder %s90, %s92
      %p96 = scmp.eq.s32.totalorder %s14, 0
      %p97 = por %p95, %p96
      %p98 = scmp.ne.s32.totalorder %s90, %s92
      %p99 = scmp.eq.s32.totalorder %s19, 1
      %p100 = por %p98, %p99
      %p101 = scmp.ne.s32.totalorder %s92, %s93
      %p102 = scmp.eq.s32.totalorder %s19, 0
      %p103 = por %p101, %p102
      %p104 = scmp.ne.s32.totalorder %s92, %s93
      %p105 = scmp.eq.s32.totalorder %s20, 1
      %p106 = por %p104, %p105
      %p108 = scmp.ne.s32.totalorder %s93, %s107
      %p109 = scmp.eq.s32.totalorder %s20, 0
      %p110 = por %p108, %p109
      %s112 = sadd.s32 %s111, 1
      %p115 = scmp.eq.s32.totalorder %s14, 1
      %p116 = scmp.ne.s32.totalorder %s111, %s113
      %p117 = scmp.eq.s32.totalorder %s14, 0
      %p118 = por %p116, %p117
      %p119 = scmp.ne.s32.totalorder %s111, %s113
      %p120 = scmp.eq.s32.totalorder %s19, 1
      %p121 = por %p119, %p120
      %p122 = scmp.ne.s32.totalorder %s113, %s114
      %p123 = scmp.eq.s32.totalorder %s19, 0
      %p124 = por %p122, %p123
      %p125 = scmp.ne.s32.totalorder %s113, %s114
      %p126 = scmp.eq.s32.totalorder %s20, 1
      %p127 = por %p125, %p126
      %p129 = scmp.ne.s32.totalorder %s114, %s128
      %p130 = scmp.eq.s32.totalorder %s20, 0
      %p131 = por %p129, %p130
      %s132 = ssub.s32 %s14, %s21
      %p133 = scmp.eq.s32.totalorder %s132, 0
      %s135 = sadd.s32 %s134, 1
      %s136 = scalar_select %p133, %s134, %s135
      %p139 = pneg %p133
      %p140 = scmp.eq.s32.totalorder %s14, 1
      %p141 = por %p139, %p140
      %p142 = scmp.ne.s32.totalorder %s134, %s137
      %p143 = scmp.eq.s32.totalorder %s14, 0
      %p144 = por %p142, %p143
      %p145 = scmp.ne.s32.totalorder %s134, %s137
      %p146 = scmp.eq.s32.totalorder %s19, 1
      %p147 = por %p145, %p146
      %p148 = scmp.ne.s32.totalorder %s137, %s138
      %p149 = scmp.eq.s32.totalorder %s19, 0
      %p150 = por %p148, %p149
      %p151 = scmp.ne.s32.totalorder %s137, %s138
      %p152 = scmp.eq.s32.totalorder %s20, 1
      %p153 = por %p151, %p152
      %p155 = scmp.ne.s32.totalorder %s138, %s154
      %p156 = scmp.eq.s32.totalorder %s20, 0
      %p157 = por %p155, %p156
      %p158 = scmp.le.s32.totalorder 1, %s14
      %p159 = scmp.lt.s32.totalorder %s14, 3
      %p160 = pnand %p158, %p159
      %p161 = pneg %p160
      // Predicated region
      $region9: #{vit_forward.5} parent=5 // pred_check
        _
      $region10: #{vit_forward.5} parent=5 // pred_check_branch
        %163 = sbr.rel (%p160) target = $region12
      $region11: #{vit_forward.5} parent=5 // pred_region
        %s164 = ssub.s32 %s14, 1
        // Predicated region
        $region13: #{vit_forward.5} parent=11 // pred_check
          %p165 = pneg %p61
        $region14: #{vit_forward.5} parent=11 // pred_check_branch
          %167 = sbr.rel (%p165) target = $region16
        $region15: #{vit_forward.5} parent=11 // pred_region
          _
        $region16: #{vit_forward.5} parent=11 // pred_fallthru
          _
        // Predicated region
        $region17: #{vit_forward.5} parent=11 // pred_check
          %p168 = pneg %p82
        $region18: #{vit_forward.5} parent=11 // pred_check_branch
          %170 = sbr.rel (%p168) target = $region20
        $region19: #{vit_forward.5} parent=11 // pred_region
          _
        $region20: #{vit_forward.5} parent=11 // pred_fallthru
          _
        // Predicated region
        $region21: #{vit_forward.5} parent=11 // pred_check
          %p171 = pneg %p103
        $region22: #{vit_forward.5} parent=11 // pred_check_branch
          %173 = sbr.rel (%p171) target = $region24
        $region23: #{vit_forward.5} parent=11 // pred_region
          _
        $region24: #{vit_forward.5} parent=11 // pred_fallthru
          _
        // Predicated region
        $region25: #{vit_forward.5} parent=11 // pred_check
          %p174 = pneg %p124
        $region26: #{vit_forward.5} parent=11 // pred_check_branch
          %176 = sbr.rel (%p174) target = $region28
        $region27: #{vit_forward.5} parent=11 // pred_region
          _
        $region28: #{vit_forward.5} parent=11 // pred_fallthru
          _
      $region12: #{vit_forward.5} parent=5 // pred_fallthru
        _
      %p177 = scmp.lt.s32.totalorder %s14, 2
      // Predicated region
      $region29: #{vit_forward.5} parent=5 // pred_check
        %p178 = pneg %p177
      $region30: #{vit_forward.5} parent=5 // pred_check_branch
        %180 = sbr.rel (%p178) target = $region32
      $region31: #{vit_forward.5} parent=5 // pred_region
        // Predicated region
        $region33: #{vit_forward.5} parent=31 // pred_check
          %p181 = pneg %p34
        $region34: #{vit_forward.5} parent=31 // pred_check_branch
          %183 = sbr.rel (%p181) target = $region36
        $region35: #{vit_forward.5} parent=31 // pred_region
          %p184 = scmp.lt.s32.totalorder %s14, 1
          %s185 = scalar_select %p184, %s14, 1
          %s186 = smul.addr %s185, 8
          %s187 = scalar_lea.vmem %s0, %s186
        $region36: #{vit_forward.5} parent=31 // pred_fallthru
          _
      $region32: #{vit_forward.5} parent=5 // pred_fallthru
        _
      %p188 = scmp.le.s32.totalorder 1, %s14
      %p189 = scmp.lt.s32.totalorder %s14, 3
      %p190 = pnand %p188, %p189
      %p191 = pneg %p190
      // Predicated region
      $region37: #{vit_forward.5} parent=5 // pred_check
        _
      $region38: #{vit_forward.5} parent=5 // pred_check_branch
        %193 = sbr.rel (%p190) target = $region40
      $region39: #{vit_forward.5} parent=5 // pred_region
        %s194 = ssub.s32 %s14, 1
        %p195 = scmp.lt.s32.totalorder %s19, 1
        %s196 = scalar_select %p195, %s19, 1
        %s197 = smul.addr %s196, 8
        %s198 = scalar_lea.vmem %s0, %s197
        %p199 = pneg %p40
        %p200 = pneg %p37
        %p201 = pneg %p61
        %p202 = pneg %p58
        %p203 = pneg %p82
        %p204 = pneg %p79
        %p205 = pneg %p103
        %p206 = pneg %p100
        %p207 = pneg %p124
        %p208 = pneg %p121
        %p209 = pneg %p150
        %p210 = pneg %p147
        %s211 = sand.u32 %s137, 1
        %s212 = scalar_lea.sflag [#allocation3], %s211
        %s213 = sand.u32 %s137, 1
        %s214 = scalar_lea.vmem [#allocation2], %s213
        %p215 = scmp.lt.s32.totalorder %s19, 1
        %s216 = scalar_select %p215, %s19, 1
        %s217 = smul.addr %s216, 8
        %s218 = scalar_lea.vmem %s0, %s217
        %v220 = vld [vmem:[%s218] sm:$0xff]
        %vm221 = vcmask 261120
        %v222 = vsel %vm221, %v220, 0.0
        %v223 = vrot.slane %v222, 4
        %v224 = vadd.f32 %v222, %v223
        %v225 = vrot.slane %v224, 2
        %v226 = vadd.f32 %v224, %v225
        %v227 = vrot.slane %v226, 1
        %v228 = vadd.f32 %v226, %v227
        %v229 = vrcp.pop 8.0
        %v230 = vmul.f32 8.0, %v229
        %v231 = vsub.f32 1.0, %v230
        %v232 = vmul.f32 %v229, %v231
        %v233 = vadd.f32 %v229, %v232
        %vm234 = vweird.f32 %v229
        %v235 = vsel %vm234, %v229, %v233
        %v236 = vmul.f32 %v228, %v235
        %v237 = vld [vmem:[%s1] sm:$0x1]
        %v238 = vld [vmem:[%s2] sm:$0x1]
        %v239 = vsel %vm221, %v236, 0.0
        %240 = vadd.xlane.f32.xlu0 %v239
        %v241 = vpop.xlane.xlu0 %240
        %v242 = vrcp.pop 32.0
        %v243 = vmul.f32 32.0, %v242
        %v244 = vsub.f32 1.0, %v243
        %v245 = vmul.f32 %v242, %v244
        %v246 = vadd.f32 %v242, %v245
        %vm247 = vweird.f32 %v242
        %v248 = vsel %vm247, %v242, %v246
        %v249 = vmul.f32 %v241, %v248
        %v250 = vsub.f32 %v236, %v249
        %v251 = vmul.f32 %v250, %v250
        %v252 = vsel %vm221, %v251, 0.0
        %253 = vadd.xlane.f32.xlu0 %v252
        %v254 = vpop.xlane.xlu0 %253
        %v255 = vmul.f32 %v254, %v248
        %v256 = vadd.f32 %v255, 1e-05
        %v257 = vrsqrt.pop %v256
        %v258 = vmul.f32 %v257, %v256
        %v259 = vmul.f32 %v258, %v257
        %v260 = vmul.f32 0.5, %v259
        %v261 = vsub.f32 1.5, %v260
        %v262 = vmul.f32 %v257, %v261
        %vm263 = vweird.f32 %v256
        %vm264 = vweird.f32 %v257
        %vm265 = vmor %vm263, %vm264
        %v266 = vsel %vm265, %v257, %v262
        %v267 = vmul.f32 %v250, %v266
        %v268 = vmul.f32 %v267, %v237
        %v269 = vadd.f32 %v268, %v238
        %v270 = vpack.c.bf16 %v269, %v269
        %v271 = vld [vmem:[%s3] sm:$0xf]
        %v272 = vld [vmem:[%s3 + $0x4] sm:$0xf]
        %v273 = vld [vmem:[%s3 + $0x8] sm:$0xf]
        %v274 = vld [vmem:[%s3 + $0xc] sm:$0xf]
        %v275 = vld [vmem:[%s4] sm:$0x1]
        %v280 = vunpack.c.l.b16 %v271
        %v281 = vunpack.c.l.b16 %v272
        %v282 = vunpack.c.l.b16 %v273
        %v283 = vunpack.c.l.b16 %v274
        %v284 = vpack.c.b16 %v281, %v280
        %v285 = vpack.c.b16 %v283, %v282
        %v289 = vsel %vm221, %v270, 0
        %291 = vmatpush.bf16.msra.mxu0 0
        %292 = vmatpush.bf16.msra.mxu0 0
        %293 = vmatpush.bf16.msra.mxu0 0
        %294 = vmatpush.bf16.msra.mxu0 0
        %295 = vmatpush.bf16.msra.mxu0 0
        %296 = vmatpush.bf16.msra.mxu0 0
        %297 = vmatpush.bf16.msra.mxu0 %v285
        %298 = vmatpush.bf16.msra.mxu0 %v284
        %299 = vmatmul.bf16.gmra.mxu0 %v289
        %v300 = vpop.f32.mrf.mxu0
        %v301 = vadd.f32 %v275, %v300
        %v302 = vpop.f32.mrf.mxu0
        %303 = vdwg.mxu0
        %304 = vst [vmem:[%s214] sm:$0x1] %v301
        %s305 = sand.u32 %s137, 1
        %s306 = scalar_lea.sflag [#allocation3], %s305
        %s307 = sand.u32 %s137, 1
        %s308 = scalar_lea.vmem [#allocation2], %s307
        // Predicated region
        $region41: #{vit_forward.5} parent=39 // pred_check
          %p309 = pneg %p147
        $region42: #{vit_forward.5} parent=39 // pred_check_branch
          %311 = sbr.rel (%p309) target = $region44
        $region43: #{vit_forward.5} parent=39 // pred_region
          %313 = vsyncadd %s306, 0
          %s314 = scalar_lea.hbm %s5, %s19
          %s316 = sshll.u32 %s308, 4
          %s317 = int_to_ptr.vmem [resolvable:$true] %s316
          %s318 = sshll.u32 %s314, 4
          %s319 = int_to_ptr.hbm [resolvable:$true] %s318
          %321 = dma.vmem_to_hbm [thread:$0]  %s317, 16, %s319, %s306
        $region44: #{vit_forward.5} parent=39 // pred_fallthru
          _
      $region40: #{vit_forward.5} parent=5 // pred_fallthru
        _
      %p322 = scmp.le.s32.totalorder 2, %s14
      // Predicated region
      $region45: #{vit_forward.5} parent=5 // pred_check
        %p323 = pneg %p322
      $region46: #{vit_forward.5} parent=5 // pred_check_branch
        %325 = sbr.rel (%p323) target = $region48
      $region47: #{vit_forward.5} parent=5 // pred_region
        %s326 = ssub.s32 %s14, 2
        // Predicated region
        $region49: #{vit_forward.5} parent=47 // pred_check
          %p327 = pneg %p153
        $region50: #{vit_forward.5} parent=47 // pred_check_branch
          %329 = sbr.rel (%p327) target = $region52
        $region51: #{vit_forward.5} parent=47 // pred_region
          %s330 = sand.u32 %s138, 1
          %s331 = scalar_lea.sflag [#allocation3], %s330
          %s332 = sand.u32 %s138, 1
          %s333 = scalar_lea.vmem [#allocation2], %s332
          %335 = dma.done %s331, 16
        $region52: #{vit_forward.5} parent=47 // pred_fallthru
          _
      $region48: #{vit_forward.5} parent=5 // pred_fallthru
        _
    $region6: #{vit_forward.5} parent=1 // loop_footer
      %s18 = sadd.s32 1, %s14
    $region7: #{vit_forward.5} parent=1 // loop_footer_branch
      %13 = sbr.rel target = $region3
    $region8: #{vit_forward.5} parent=1 // loop_exit
      _
    %336 = vsyncpa [#allocation3], 1
    %s337 = scalar_lea.sflag [#allocation3], 1
    %338 = vsyncpa %s337, 1

// kernel: vit_forward.4
$region0: #{vit_forward.4}
  #allocation0 [shape = 'u32[]', space=smem, size = 0x4, offset = 0x4, fixed_abs, tag = 'smem constant byte address 0x4 - core index']
  #allocation1 [shape = 'u32[72,128]{1,0:T(1,128)}', space=vmem, size = 0x9000, scoped, tag = 'internal scratch']
  #allocation2 [shape = 'f32[8,32]{1,0:T(8,128)}', space=vmem, size = 0x1000, scoped, tag = 'scratch operand']
  #allocation3 [shape = 'bf16[8,32]{1,0:T(8,128)(2,1)}', space=vmem, size = 0x800, scoped, tag = 'scratch operand']
  %s0 = inlined_call_operand.vmem [shape: f32[2,8,32], index: 0, kind: input, shape index: {}]
  %s1 = inlined_call_operand.vmem [shape: f32[2,1,32], index: 1, kind: input, shape index: {}]
  %s2 = inlined_call_operand.vmem [shape: f32[2,1,32], index: 2, kind: input, shape index: {}]
  %s3 = inlined_call_operand.vmem [shape: bf16[2,32,96], index: 3, kind: input, shape index: {}]
  %s4 = inlined_call_operand.vmem [shape: f32[2,1,96], index: 4, kind: input, shape index: {}]
  %s5 = inlined_call_operand.vmem [shape: bf16[2,32,32], index: 5, kind: input, shape index: {}]
  %s6 = inlined_call_operand.vmem [shape: f32[2,1,32], index: 6, kind: input, shape index: {}]
  %s7 = inlined_call_operand.vmem [shape: f32[2,1,32], index: 7, kind: input, shape index: {}]
  %s8 = inlined_call_operand.vmem [shape: f32[2,1,32], index: 8, kind: input, shape index: {}]
  %s9 = inlined_call_operand.vmem [shape: bf16[2,32,128], index: 9, kind: input, shape index: {}]
  %s10 = inlined_call_operand.vmem [shape: f32[2,1,128], index: 10, kind: input, shape index: {}]
  %s11 = inlined_call_operand.vmem [shape: bf16[2,128,32], index: 11, kind: input, shape index: {}]
  %s12 = inlined_call_operand.vmem [shape: f32[2,1,32], index: 12, kind: input, shape index: {}]
  %s13 = inlined_call_operand.vmem [shape: f32[2,8,32], index: 13, kind: output, shape index: {}]
  %s14 = sld [smem:[#allocation0]]
  $region93: #{vit_forward.4} parent=0
    _
  %s16 = ssub.s32 1, %s14
  %s17 = scalar_select 0, %s16, %s14
  loop: start=0, step=1, limit=6
  $region2: #{vit_forward.4} parent=0 // loop_pre_header
    _
  $region3: #{vit_forward.4} parent=0 // loop_header
    %s19 = sphi 0, %s23
    %p20 = scmp.ge.s32.totalorder %s19, 6
    %s26 = sphi 0, %s38
    %s27 = sphi 0, %s34
    %s28 = sphi 0, %s26
    %s29 = sphi 0, %s27
    %s30 = sphi 0, %s28
    %s31 = sphi 0, %s29
    %s41 = sphi 0, %s43
    %s44 = sphi 0, %s41
    %s45 = sphi 0, %s44
    %s61 = sphi 0, %s45
    %s67 = sphi 0, %s69
    %s70 = sphi 0, %s67
    %s71 = sphi 0, %s70
    %s87 = sphi 0, %s71
    %s93 = sphi 0, %s95
    %s96 = sphi 0, %s93
    %s97 = sphi 0, %s96
    %s113 = sphi 0, %s97
    %s119 = sphi 0, %s121
    %s122 = sphi 0, %s119
    %s123 = sphi 0, %s122
    %s139 = sphi 0, %s123
    %s145 = sphi 0, %s147
    %s148 = sphi 0, %s145
    %s149 = sphi 0, %s148
    %s165 = sphi 0, %s149
    %s171 = sphi 0, %s173
    %s174 = sphi 0, %s171
    %s175 = sphi 0, %s174
    %s191 = sphi 0, %s175
    %s197 = sphi 0, %s199
    %s200 = sphi 0, %s197
    %s201 = sphi 0, %s200
    %s217 = sphi 0, %s201
    %s223 = sphi 0, %s225
    %s226 = sphi 0, %s223
    %s227 = sphi 0, %s226
    %s243 = sphi 0, %s227
    %s249 = sphi 0, %s251
    %s252 = sphi 0, %s249
    %s253 = sphi 0, %s252
    %s269 = sphi 0, %s253
    %s275 = sphi 0, %s277
    %s278 = sphi 0, %s275
    %s279 = sphi 0, %s278
    %s295 = sphi 0, %s279
    %s301 = sphi 0, %s303
    %s304 = sphi 0, %s301
    %s305 = sphi 0, %s304
    %s321 = sphi 0, %s305
    %s327 = sphi 0, %s329
    %s330 = sphi 0, %s327
    %s331 = sphi 0, %s330
    %s347 = sphi 0, %s331
    %s353 = sphi 0, %s355
    %s356 = sphi 0, %s353
    %s357 = sphi 0, %s356
    %s373 = sphi 0, %s357
    %s379 = sphi 0, %s381
    %s382 = sphi 0, %s379
    %s383 = sphi 0, %s382
    %s399 = sphi 0, %s383
  $region4: #{vit_forward.4} parent=0 // loop_header_branch
    %22 = sbr.rel (%p20) target = $region8
  $region5: #{vit_forward.4} parent=0 // loop_body
    %s24 = ssub.s32 %s19, 1
    %s25 = ssub.s32 %s19, 2
    %s32 = sadd.s32 1, %s27
    %p33 = scmp.ge.s32.totalorder %s32, 2
    %s34 = scalar_select %p33, 0, %s32
    %s35 = sadd.s32 1, %s26
    %s36 = scalar_select %p33, %s35, %s26
    %p37 = scmp.ge.s32.totalorder %s36, 2
    %s38 = scalar_select %p37, 0, %s36
    %s39 = ssub.s32 %s26, %s38
    %p40 = scmp.eq.s32.totalorder %s39, 0
    %s42 = sadd.s32 %s41, 1
    %s43 = scalar_select %p40, %s41, %s42
    %p46 = pneg %p40
    %p47 = scmp.eq.s32.totalorder %s19, 3
    %p48 = por %p46, %p47
    %p49 = scmp.ne.s32.totalorder %s41, %s44
    %p50 = scmp.eq.s32.totalorder %s19, 0
    %p51 = por %p49, %p50
    %p52 = scmp.ne.s32.totalorder %s41, %s44
    %p53 = scmp.eq.s32.totalorder %s24, 3
    %p54 = por %p52, %p53
    %p55 = scmp.ne.s32.totalorder %s44, %s45
    %p56 = scmp.eq.s32.totalorder %s24, 0
    %p57 = por %p55, %p56
    %p58 = scmp.ne.s32.totalorder %s44, %s45
    %p59 = scmp.eq.s32.totalorder %s25, 3
    %p60 = por %p58, %p59
    %p62 = scmp.ne.s32.totalorder %s45, %s61
    %p63 = scmp.eq.s32.totalorder %s25, 0
    %p64 = por %p62, %p63
    %s65 = ssub.s32 %s27, %s34
    %p66 = scmp.eq.s32.totalorder %s65, 0
    %s68 = sadd.s32 %s67, 1
    %s69 = scalar_select %p66, %s67, %s68
    %p72 = pneg %p66
    %p73 = scmp.eq.s32.totalorder %s19, 3
    %p74 = por %p72, %p73
    %p75 = scmp.ne.s32.totalorder %s67, %s70
    %p76 = scmp.eq.s32.totalorder %s19, 0
    %p77 = por %p75, %p76
    %p78 = scmp.ne.s32.totalorder %s67, %s70
    %p79 = scmp.eq.s32.totalorder %s24, 3
    %p80 = por %p78, %p79
    %p81 = scmp.ne.s32.totalorder %s70, %s71
    %p82 = scmp.eq.s32.totalorder %s24, 0
    %p83 = por %p81, %p82
    %p84 = scmp.ne.s32.totalorder %s70, %s71
    %p85 = scmp.eq.s32.totalorder %s25, 3
    %p86 = por %p84, %p85
    %p88 = scmp.ne.s32.totalorder %s71, %s87
    %p89 = scmp.eq.s32.totalorder %s25, 0
    %p90 = por %p88, %p89
    %s91 = ssub.s32 %s27, %s34
    %p92 = scmp.eq.s32.totalorder %s91, 0
    %s94 = sadd.s32 %s93, 1
    %s95 = scalar_select %p92, %s93, %s94
    %p98 = pneg %p92
    %p99 = scmp.eq.s32.totalorder %s19, 3
    %p100 = por %p98, %p99
    %p101 = scmp.ne.s32.totalorder %s93, %s96
    %p102 = scmp.eq.s32.totalorder %s19, 0
    %p103 = por %p101, %p102
    %p104 = scmp.ne.s32.totalorder %s93, %s96
    %p105 = scmp.eq.s32.totalorder %s24, 3
    %p106 = por %p104, %p105
    %p107 = scmp.ne.s32.totalorder %s96, %s97
    %p108 = scmp.eq.s32.totalorder %s24, 0
    %p109 = por %p107, %p108
    %p110 = scmp.ne.s32.totalorder %s96, %s97
    %p111 = scmp.eq.s32.totalorder %s25, 3
    %p112 = por %p110, %p111
    %p114 = scmp.ne.s32.totalorder %s97, %s113
    %p115 = scmp.eq.s32.totalorder %s25, 0
    %p116 = por %p114, %p115
    %s117 = ssub.s32 %s27, %s34
    %p118 = scmp.eq.s32.totalorder %s117, 0
    %s120 = sadd.s32 %s119, 1
    %s121 = scalar_select %p118, %s119, %s120
    %p124 = pneg %p118
    %p125 = scmp.eq.s32.totalorder %s19, 3
    %p126 = por %p124, %p125
    %p127 = scmp.ne.s32.totalorder %s119, %s122
    %p128 = scmp.eq.s32.totalorder %s19, 0
    %p129 = por %p127, %p128
    %p130 = scmp.ne.s32.totalorder %s119, %s122
    %p131 = scmp.eq.s32.totalorder %s24, 3
    %p132 = por %p130, %p131
    %p133 = scmp.ne.s32.totalorder %s122, %s123
    %p134 = scmp.eq.s32.totalorder %s24, 0
    %p135 = por %p133, %p134
    %p136 = scmp.ne.s32.totalorder %s122, %s123
    %p137 = scmp.eq.s32.totalorder %s25, 3
    %p138 = por %p136, %p137
    %p140 = scmp.ne.s32.totalorder %s123, %s139
    %p141 = scmp.eq.s32.totalorder %s25, 0
    %p142 = por %p140, %p141
    %s143 = ssub.s32 %s27, %s34
    %p144 = scmp.eq.s32.totalorder %s143, 0
    %s146 = sadd.s32 %s145, 1
    %s147 = scalar_select %p144, %s145, %s146
    %p150 = pneg %p144
    %p151 = scmp.eq.s32.totalorder %s19, 3
    %p152 = por %p150, %p151
    %p153 = scmp.ne.s32.totalorder %s145, %s148
    %p154 = scmp.eq.s32.totalorder %s19, 0
    %p155 = por %p153, %p154
    %p156 = scmp.ne.s32.totalorder %s145, %s148
    %p157 = scmp.eq.s32.totalorder %s24, 3
    %p158 = por %p156, %p157
    %p159 = scmp.ne.s32.totalorder %s148, %s149
    %p160 = scmp.eq.s32.totalorder %s24, 0
    %p161 = por %p159, %p160
    %p162 = scmp.ne.s32.totalorder %s148, %s149
    %p163 = scmp.eq.s32.totalorder %s25, 3
    %p164 = por %p162, %p163
    %p166 = scmp.ne.s32.totalorder %s149, %s165
    %p167 = scmp.eq.s32.totalorder %s25, 0
    %p168 = por %p166, %p167
    %s169 = ssub.s32 %s27, %s34
    %p170 = scmp.eq.s32.totalorder %s169, 0
    %s172 = sadd.s32 %s171, 1
    %s173 = scalar_select %p170, %s171, %s172
    %p176 = pneg %p170
    %p177 = scmp.eq.s32.totalorder %s19, 3
    %p178 = por %p176, %p177
    %p179 = scmp.ne.s32.totalorder %s171, %s174
    %p180 = scmp.eq.s32.totalorder %s19, 0
    %p181 = por %p179, %p180
    %p182 = scmp.ne.s32.totalorder %s171, %s174
    %p183 = scmp.eq.s32.totalorder %s24, 3
    %p184 = por %p182, %p183
    %p185 = scmp.ne.s32.totalorder %s174, %s175
    %p186 = scmp.eq.s32.totalorder %s24, 0
    %p187 = por %p185, %p186
    %p188 = scmp.ne.s32.totalorder %s174, %s175
    %p189 = scmp.eq.s32.totalorder %s25, 3
    %p190 = por %p188, %p189
    %p192 = scmp.ne.s32.totalorder %s175, %s191
    %p193 = scmp.eq.s32.totalorder %s25, 0
    %p194 = por %p192, %p193
    %s195 = ssub.s32 %s27, %s34
    %p196 = scmp.eq.s32.totalorder %s195, 0
    %s198 = sadd.s32 %s197, 1
    %s199 = scalar_select %p196, %s197, %s198
    %p202 = pneg %p196
    %p203 = scmp.eq.s32.totalorder %s19, 3
    %p204 = por %p202, %p203
    %p205 = scmp.ne.s32.totalorder %s197, %s200
    %p206 = scmp.eq.s32.totalorder %s19, 0
    %p207 = por %p205, %p206
    %p208 = scmp.ne.s32.totalorder %s197, %s200
    %p209 = scmp.eq.s32.totalorder %s24, 3
    %p210 = por %p208, %p209
    %p211 = scmp.ne.s32.totalorder %s200, %s201
    %p212 = scmp.eq.s32.totalorder %s24, 0
    %p213 = por %p211, %p212
    %p214 = scmp.ne.s32.totalorder %s200, %s201
    %p215 = scmp.eq.s32.totalorder %s25, 3
    %p216 = por %p214, %p215
    %p218 = scmp.ne.s32.totalorder %s201, %s217
    %p219 = scmp.eq.s32.totalorder %s25, 0
    %p220 = por %p218, %p219
    %s221 = ssub.s32 %s27, %s34
    %p222 = scmp.eq.s32.totalorder %s221, 0
    %s224 = sadd.s32 %s223, 1
    %s225 = scalar_select %p222, %s223, %s224
    %p228 = pneg %p222
    %p229 = scmp.eq.s32.totalorder %s19, 3
    %p230 = por %p228, %p229
    %p231 = scmp.ne.s32.totalorder %s223, %s226
    %p232 = scmp.eq.s32.totalorder %s19, 0
    %p233 = por %p231, %p232
    %p234 = scmp.ne.s32.totalorder %s223, %s226
    %p235 = scmp.eq.s32.totalorder %s24, 3
    %p236 = por %p234, %p235
    %p237 = scmp.ne.s32.totalorder %s226, %s227
    %p238 = scmp.eq.s32.totalorder %s24, 0
    %p239 = por %p237, %p238
    %p240 = scmp.ne.s32.totalorder %s226, %s227
    %p241 = scmp.eq.s32.totalorder %s25, 3
    %p242 = por %p240, %p241
    %p244 = scmp.ne.s32.totalorder %s227, %s243
    %p245 = scmp.eq.s32.totalorder %s25, 0
    %p246 = por %p244, %p245
    %s247 = ssub.s32 %s27, %s34
    %p248 = scmp.eq.s32.totalorder %s247, 0
    %s250 = sadd.s32 %s249, 1
    %s251 = scalar_select %p248, %s249, %s250
    %p254 = pneg %p248
    %p255 = scmp.eq.s32.totalorder %s19, 3
    %p256 = por %p254, %p255
    %p257 = scmp.ne.s32.totalorder %s249, %s252
    %p258 = scmp.eq.s32.totalorder %s19, 0
    %p259 = por %p257, %p258
    %p260 = scmp.ne.s32.totalorder %s249, %s252
    %p261 = scmp.eq.s32.totalorder %s24, 3
    %p262 = por %p260, %p261
    %p263 = scmp.ne.s32.totalorder %s252, %s253
    %p264 = scmp.eq.s32.totalorder %s24, 0
    %p265 = por %p263, %p264
    %p266 = scmp.ne.s32.totalorder %s252, %s253
    %p267 = scmp.eq.s32.totalorder %s25, 3
    %p268 = por %p266, %p267
    %p270 = scmp.ne.s32.totalorder %s253, %s269
    %p271 = scmp.eq.s32.totalorder %s25, 0
    %p272 = por %p270, %p271
    %s273 = ssub.s32 %s27, %s34
    %p274 = scmp.eq.s32.totalorder %s273, 0
    %s276 = sadd.s32 %s275, 1
    %s277 = scalar_select %p274, %s275, %s276
    %p280 = pneg %p274
    %p281 = scmp.eq.s32.totalorder %s19, 3
    %p282 = por %p280, %p281
    %p283 = scmp.ne.s32.totalorder %s275, %s278
    %p284 = scmp.eq.s32.totalorder %s19, 0
    %p285 = por %p283, %p284
    %p286 = scmp.ne.s32.totalorder %s275, %s278
    %p287 = scmp.eq.s32.totalorder %s24, 3
    %p288 = por %p286, %p287
    %p289 = scmp.ne.s32.totalorder %s278, %s279
    %p290 = scmp.eq.s32.totalorder %s24, 0
    %p291 = por %p289, %p290
    %p292 = scmp.ne.s32.totalorder %s278, %s279
    %p293 = scmp.eq.s32.totalorder %s25, 3
    %p294 = por %p292, %p293
    %p296 = scmp.ne.s32.totalorder %s279, %s295
    %p297 = scmp.eq.s32.totalorder %s25, 0
    %p298 = por %p296, %p297
    %s299 = ssub.s32 %s27, %s34
    %p300 = scmp.eq.s32.totalorder %s299, 0
    %s302 = sadd.s32 %s301, 1
    %s303 = scalar_select %p300, %s301, %s302
    %p306 = pneg %p300
    %p307 = scmp.eq.s32.totalorder %s19, 3
    %p308 = por %p306, %p307
    %p309 = scmp.ne.s32.totalorder %s301, %s304
    %p310 = scmp.eq.s32.totalorder %s19, 0
    %p311 = por %p309, %p310
    %p312 = scmp.ne.s32.totalorder %s301, %s304
    %p313 = scmp.eq.s32.totalorder %s24, 3
    %p314 = por %p312, %p313
    %p315 = scmp.ne.s32.totalorder %s304, %s305
    %p316 = scmp.eq.s32.totalorder %s24, 0
    %p317 = por %p315, %p316
    %p318 = scmp.ne.s32.totalorder %s304, %s305
    %p319 = scmp.eq.s32.totalorder %s25, 3
    %p320 = por %p318, %p319
    %p322 = scmp.ne.s32.totalorder %s305, %s321
    %p323 = scmp.eq.s32.totalorder %s25, 0
    %p324 = por %p322, %p323
    %s325 = ssub.s32 %s27, %s34
    %p326 = scmp.eq.s32.totalorder %s325, 0
    %s328 = sadd.s32 %s327, 1
    %s329 = scalar_select %p326, %s327, %s328
    %p332 = pneg %p326
    %p333 = scmp.eq.s32.totalorder %s19, 3
    %p334 = por %p332, %p333
    %p335 = scmp.ne.s32.totalorder %s327, %s330
    %p336 = scmp.eq.s32.totalorder %s19, 0
    %p337 = por %p335, %p336
    %p338 = scmp.ne.s32.totalorder %s327, %s330
    %p339 = scmp.eq.s32.totalorder %s24, 3
    %p340 = por %p338, %p339
    %p341 = scmp.ne.s32.totalorder %s330, %s331
    %p342 = scmp.eq.s32.totalorder %s24, 0
    %p343 = por %p341, %p342
    %p344 = scmp.ne.s32.totalorder %s330, %s331
    %p345 = scmp.eq.s32.totalorder %s25, 3
    %p346 = por %p344, %p345
    %p348 = scmp.ne.s32.totalorder %s331, %s347
    %p349 = scmp.eq.s32.totalorder %s25, 0
    %p350 = por %p348, %p349
    %s351 = ssub.s32 %s27, %s34
    %p352 = scmp.eq.s32.totalorder %s351, 0
    %s354 = sadd.s32 %s353, 1
    %s355 = scalar_select %p352, %s353, %s354
    %p358 = pneg %p352
    %p359 = scmp.eq.s32.totalorder %s19, 3
    %p360 = por %p358, %p359
    %p361 = scmp.ne.s32.totalorder %s353, %s356
    %p362 = scmp.eq.s32.totalorder %s19, 0
    %p363 = por %p361, %p362
    %p364 = scmp.ne.s32.totalorder %s353, %s356
    %p365 = scmp.eq.s32.totalorder %s24, 3
    %p366 = por %p364, %p365
    %p367 = scmp.ne.s32.totalorder %s356, %s357
    %p368 = scmp.eq.s32.totalorder %s24, 0
    %p369 = por %p367, %p368
    %p370 = scmp.ne.s32.totalorder %s356, %s357
    %p371 = scmp.eq.s32.totalorder %s25, 3
    %p372 = por %p370, %p371
    %p374 = scmp.ne.s32.totalorder %s357, %s373
    %p375 = scmp.eq.s32.totalorder %s25, 0
    %p376 = por %p374, %p375
    %s377 = ssub.s32 %s26, %s38
    %p378 = scmp.eq.s32.totalorder %s377, 0
    %s380 = sadd.s32 %s379, 1
    %s381 = scalar_select %p378, %s379, %s380
    %p384 = pneg %p378
    %p385 = scmp.eq.s32.totalorder %s19, 3
    %p386 = por %p384, %p385
    %p387 = scmp.ne.s32.totalorder %s379, %s382
    %p388 = scmp.eq.s32.totalorder %s19, 0
    %p389 = por %p387, %p388
    %p390 = scmp.ne.s32.totalorder %s379, %s382
    %p391 = scmp.eq.s32.totalorder %s24, 3
    %p392 = por %p390, %p391
    %p393 = scmp.ne.s32.totalorder %s382, %s383
    %p394 = scmp.eq.s32.totalorder %s24, 0
    %p395 = por %p393, %p394
    %p396 = scmp.ne.s32.totalorder %s382, %s383
    %p397 = scmp.eq.s32.totalorder %s25, 3
    %p398 = por %p396, %p397
    %p400 = scmp.ne.s32.totalorder %s383, %s399
    %p401 = scmp.eq.s32.totalorder %s25, 0
    %p402 = por %p400, %p401
    %p403 = scmp.le.s32.totalorder 1, %s19
    %p404 = scmp.lt.s32.totalorder %s19, 5
    %p405 = pnand %p403, %p404
    %p406 = pneg %p405
    // Predicated region
    $region9: #{vit_forward.4} parent=5 // pred_check
      _
    $region10: #{vit_forward.4} parent=5 // pred_check_branch
      %408 = sbr.rel (%p405) target = $region12
    $region11: #{vit_forward.4} parent=5 // pred_region
      %s409 = ssub.s32 %s19, 1
    $region12: #{vit_forward.4} parent=5 // pred_fallthru
      _
    %p410 = scmp.lt.s32.totalorder %s19, 4
    // Predicated region
    $region13: #{vit_forward.4} parent=5 // pred_check
      %p411 = pneg %p410
    $region14: #{vit_forward.4} parent=5 // pred_check_branch
      %413 = sbr.rel (%p411) target = $region16
    $region15: #{vit_forward.4} parent=5 // pred_region
      // Predicated region
      $region17: #{vit_forward.4} parent=15 // pred_check
        %p414 = pneg %p51
      $region18: #{vit_forward.4} parent=15 // pred_check_branch
        %416 = sbr.rel (%p414) target = $region20
      $region19: #{vit_forward.4} parent=15 // pred_region
        %p417 = scmp.lt.s32.totalorder %s26, 1
        %s418 = scalar_select %p417, %s26, 1
        %s419 = smul.addr %s418, 8
        %s420 = scalar_lea.vmem %s0, %s419
      $region20: #{vit_forward.4} parent=15 // pred_fallthru
        _
      // Predicated region
      $region21: #{vit_forward.4} parent=15 // pred_check
        %p421 = pneg %p77
      $region22: #{vit_forward.4} parent=15 // pred_check_branch
        %423 = sbr.rel (%p421) target = $region24
      $region23: #{vit_forward.4} parent=15 // pred_region
        %p424 = scmp.lt.s32.totalorder %s27, 1
        %s425 = scalar_select %p424, %s27, 1
        %s426 = scalar_lea.vmem %s1, %s425
      $region24: #{vit_forward.4} parent=15 // pred_fallthru
        _
      // Predicated region
      $region25: #{vit_forward.4} parent=15 // pred_check
        %p427 = pneg %p103
      $region26: #{vit_forward.4} parent=15 // pred_check_branch
        %429 = sbr.rel (%p427) target = $region28
      $region27: #{vit_forward.4} parent=15 // pred_region
        %p430 = scmp.lt.s32.totalorder %s27, 1
        %s431 = scalar_select %p430, %s27, 1
        %s432 = scalar_lea.vmem %s2, %s431
      $region28: #{vit_forward.4} parent=15 // pred_fallthru
        _
      // Predicated region
      $region29: #{vit_forward.4} parent=15 // pred_check
        %p433 = pneg %p129
      $region30: #{vit_forward.4} parent=15 // pred_check_branch
        %435 = sbr.rel (%p433) target = $region32
      $region31: #{vit_forward.4} parent=15 // pred_region
        %p436 = scmp.lt.s32.totalorder %s27, 1
        %s437 = scalar_select %p436, %s27, 1
        %s438 = smul.addr %s437, 4
        %s439 = smul.addr %s438, 4
        %s440 = scalar_lea.vmem %s3, %s439
      $region32: #{vit_forward.4} parent=15 // pred_fallthru
        _
      // Predicated region
      $region33: #{vit_forward.4} parent=15 // pred_check
        %p441 = pneg %p155
      $region34: #{vit_forward.4} parent=15 // pred_check_branch
        %443 = sbr.rel (%p441) target = $region36
      $region35: #{vit_forward.4} parent=15 // pred_region
        %p444 = scmp.lt.s32.totalorder %s27, 1
        %s445 = scalar_select %p444, %s27, 1
        %s446 = scalar_lea.vmem %s4, %s445
      $region36: #{vit_forward.4} parent=15 // pred_fallthru
        _
      // Predicated region
      $region37: #{vit_forward.4} parent=15 // pred_check
        %p447 = pneg %p181
      $region38: #{vit_forward.4} parent=15 // pred_check_branch
        %449 = sbr.rel (%p447) target = $region40
      $region39: #{vit_forward.4} parent=15 // pred_region
        %p450 = scmp.lt.s32.totalorder %s27, 1
        %s451 = scalar_select %p450, %s27, 1
        %s452 = smul.addr %s451, 4
        %s453 = smul.addr %s452, 4
        %s454 = scalar_lea.vmem %s5, %s453
      $region40: #{vit_forward.4} parent=15 // pred_fallthru
        _
      // Predicated region
      $region41: #{vit_forward.4} parent=15 // pred_check
        %p455 = pneg %p207
      $region42: #{vit_forward.4} parent=15 // pred_check_branch
        %457 = sbr.rel (%p455) target = $region44
      $region43: #{vit_forward.4} parent=15 // pred_region
        %p458 = scmp.lt.s32.totalorder %s27, 1
        %s459 = scalar_select %p458, %s27, 1
        %s460 = scalar_lea.vmem %s6, %s459
      $region44: #{vit_forward.4} parent=15 // pred_fallthru
        _
      // Predicated region
      $region45: #{vit_forward.4} parent=15 // pred_check
        %p461 = pneg %p233
      $region46: #{vit_forward.4} parent=15 // pred_check_branch
        %463 = sbr.rel (%p461) target = $region48
      $region47: #{vit_forward.4} parent=15 // pred_region
        %p464 = scmp.lt.s32.totalorder %s27, 1
        %s465 = scalar_select %p464, %s27, 1
        %s466 = scalar_lea.vmem %s7, %s465
      $region48: #{vit_forward.4} parent=15 // pred_fallthru
        _
      // Predicated region
      $region49: #{vit_forward.4} parent=15 // pred_check
        %p467 = pneg %p259
      $region50: #{vit_forward.4} parent=15 // pred_check_branch
        %469 = sbr.rel (%p467) target = $region52
      $region51: #{vit_forward.4} parent=15 // pred_region
        %p470 = scmp.lt.s32.totalorder %s27, 1
        %s471 = scalar_select %p470, %s27, 1
        %s472 = scalar_lea.vmem %s8, %s471
      $region52: #{vit_forward.4} parent=15 // pred_fallthru
        _
      // Predicated region
      $region53: #{vit_forward.4} parent=15 // pred_check
        %p473 = pneg %p285
      $region54: #{vit_forward.4} parent=15 // pred_check_branch
        %475 = sbr.rel (%p473) target = $region56
      $region55: #{vit_forward.4} parent=15 // pred_region
        %p476 = scmp.lt.s32.totalorder %s27, 1
        %s477 = scalar_select %p476, %s27, 1
        %s478 = smul.addr %s477, 4
        %s479 = smul.addr %s478, 4
        %s480 = scalar_lea.vmem %s9, %s479
      $region56: #{vit_forward.4} parent=15 // pred_fallthru
        _
      // Predicated region
      $region57: #{vit_forward.4} parent=15 // pred_check
        %p481 = pneg %p311
      $region58: #{vit_forward.4} parent=15 // pred_check_branch
        %483 = sbr.rel (%p481) target = $region60
      $region59: #{vit_forward.4} parent=15 // pred_region
        %p484 = scmp.lt.s32.totalorder %s27, 1
        %s485 = scalar_select %p484, %s27, 1
        %s486 = scalar_lea.vmem %s10, %s485
      $region60: #{vit_forward.4} parent=15 // pred_fallthru
        _
      // Predicated region
      $region61: #{vit_forward.4} parent=15 // pred_check
        %p487 = pneg %p337
      $region62: #{vit_forward.4} parent=15 // pred_check_branch
        %489 = sbr.rel (%p487) target = $region64
      $region63: #{vit_forward.4} parent=15 // pred_region
        %p490 = scmp.lt.s32.totalorder %s27, 1
        %s491 = scalar_select %p490, %s27, 1
        %s492 = smul.addr %s491, 16
        %s493 = smul.addr %s492, 4
        %s494 = scalar_lea.vmem %s11, %s493
      $region64: #{vit_forward.4} parent=15 // pred_fallthru
        _
      // Predicated region
      $region65: #{vit_forward.4} parent=15 // pred_check
        %p495 = pneg %p363
      $region66: #{vit_forward.4} parent=15 // pred_check_branch
        %497 = sbr.rel (%p495) target = $region68
      $region67: #{vit_forward.4} parent=15 // pred_region
        %p498 = scmp.lt.s32.totalorder %s27, 1
        %s499 = scalar_select %p498, %s27, 1
        %s500 = scalar_lea.vmem %s12, %s499
      $region68: #{vit_forward.4} parent=15 // pred_fallthru
        _
    $region16: #{vit_forward.4} parent=5 // pred_fallthru
      _
    %p501 = scmp.le.s32.totalorder 1, %s19
    %p502 = scmp.lt.s32.totalorder %s19, 5
    %p503 = pnand %p501, %p502
    %p504 = pneg %p503
    // Predicated region
    $region69: #{vit_forward.4} parent=5 // pred_check
      _
    $region70: #{vit_forward.4} parent=5 // pred_check_branch
      %506 = sbr.rel (%p503) target = $region72
    $region71: #{vit_forward.4} parent=5 // pred_region
      %s507 = ssub.s32 %s19, 1
      %p508 = scmp.lt.s32.totalorder %s28, 1
      %s509 = scalar_select %p508, %s28, 1
      %s510 = smul.addr %s509, 8
      %s511 = scalar_lea.vmem %s0, %s510
      %p512 = pneg %p57
      %p513 = pneg %p54
      %p514 = scmp.lt.s32.totalorder %s29, 1
      %s515 = scalar_select %p514, %s29, 1
      %s516 = scalar_lea.vmem %s1, %s515
      %p517 = pneg %p83
      %p518 = pneg %p80
      %p519 = scmp.lt.s32.totalorder %s29, 1
      %s520 = scalar_select %p519, %s29, 1
      %s521 = scalar_lea.vmem %s2, %s520
      %p522 = pneg %p109
      %p523 = pneg %p106
      %p524 = scmp.lt.s32.totalorder %s29, 1
      %s525 = scalar_select %p524, %s29, 1
      %s526 = smul.addr %s525, 4
      %s527 = smul.addr %s526, 4
      %s528 = scalar_lea.vmem %s3, %s527
      %p529 = pneg %p135
      %p530 = pneg %p132
      %p531 = scmp.lt.s32.totalorder %s29, 1
      %s532 = scalar_select %p531, %s29, 1
      %s533 = scalar_lea.vmem %s4, %s532
      %p534 = pneg %p161
      %p535 = pneg %p158
      %p536 = scmp.lt.s32.totalorder %s29, 1
      %s537 = scalar_select %p536, %s29, 1
      %s538 = smul.addr %s537, 4
      %s539 = smul.addr %s538, 4
      %s540 = scalar_lea.vmem %s5, %s539
      %p541 = pneg %p187
      %p542 = pneg %p184
      %p543 = scmp.lt.s32.totalorder %s29, 1
      %s544 = scalar_select %p543, %s29, 1
      %s545 = scalar_lea.vmem %s6, %s544
      %p546 = pneg %p213
      %p547 = pneg %p210
      %p548 = scmp.lt.s32.totalorder %s29, 1
      %s549 = scalar_select %p548, %s29, 1
      %s550 = scalar_lea.vmem %s7, %s549
      %p551 = pneg %p239
      %p552 = pneg %p236
      %p553 = scmp.lt.s32.totalorder %s29, 1
      %s554 = scalar_select %p553, %s29, 1
      %s555 = scalar_lea.vmem %s8, %s554
      %p556 = pneg %p265
      %p557 = pneg %p262
      %p558 = scmp.lt.s32.totalorder %s29, 1
      %s559 = scalar_select %p558, %s29, 1
      %s560 = smul.addr %s559, 4
      %s561 = smul.addr %s560, 4
      %s562 = scalar_lea.vmem %s9, %s561
      %p563 = pneg %p291
      %p564 = pneg %p288
      %p565 = scmp.lt.s32.totalorder %s29, 1
      %s566 = scalar_select %p565, %s29, 1
      %s567 = scalar_lea.vmem %s10, %s566
      %p568 = pneg %p317
      %p569 = pneg %p314
      %p570 = scmp.lt.s32.totalorder %s29, 1
      %s571 = scalar_select %p570, %s29, 1
      %s572 = smul.addr %s571, 16
      %s573 = smul.addr %s572, 4
      %s574 = scalar_lea.vmem %s11, %s573
      %p575 = pneg %p343
      %p576 = pneg %p340
      %p577 = scmp.lt.s32.totalorder %s29, 1
      %s578 = scalar_select %p577, %s29, 1
      %s579 = scalar_lea.vmem %s12, %s578
      %p580 = pneg %p369
      %p581 = pneg %p366
      %p582 = pneg %p395
      %p583 = pneg %p392
      %p584 = scmp.lt.s32.totalorder %s28, 1
      %s585 = scalar_select %p584, %s28, 1
      %s586 = smul.addr %s585, 8
      %s587 = scalar_lea.vmem %s13, %s586
      %p588 = scmp.lt.s32.totalorder %s28, 1
      %s589 = scalar_select %p588, %s28, 1
      %s590 = smul.addr %s589, 8
      %s591 = scalar_lea.vmem %s0, %s590
      %p592 = scmp.lt.s32.totalorder %s29, 1
      %s593 = scalar_select %p592, %s29, 1
      %s594 = scalar_lea.vmem %s1, %s593
      %p595 = scmp.lt.s32.totalorder %s29, 1
      %s596 = scalar_select %p595, %s29, 1
      %s597 = scalar_lea.vmem %s2, %s596
      %p598 = scmp.lt.s32.totalorder %s29, 1
      %s599 = scalar_select %p598, %s29, 1
      %s600 = smul.addr %s599, 4
      %s601 = smul.addr %s600, 4
      %s602 = scalar_lea.vmem %s3, %s601
      %p603 = scmp.lt.s32.totalorder %s29, 1
      %s604 = scalar_select %p603, %s29, 1
      %s605 = scalar_lea.vmem %s4, %s604
      %p606 = scmp.lt.s32.totalorder %s29, 1
      %s607 = scalar_select %p606, %s29, 1
      %s608 = smul.addr %s607, 4
      %s609 = smul.addr %s608, 4
      %s610 = scalar_lea.vmem %s5, %s609
      %p611 = scmp.lt.s32.totalorder %s29, 1
      %s612 = scalar_select %p611, %s29, 1
      %s613 = scalar_lea.vmem %s6, %s612
      %p614 = scmp.lt.s32.totalorder %s29, 1
      %s615 = scalar_select %p614, %s29, 1
      %s616 = scalar_lea.vmem %s7, %s615
      %p617 = scmp.lt.s32.totalorder %s29, 1
      %s618 = scalar_select %p617, %s29, 1
      %s619 = scalar_lea.vmem %s8, %s618
      %p620 = scmp.lt.s32.totalorder %s29, 1
      %s621 = scalar_select %p620, %s29, 1
      %s622 = smul.addr %s621, 4
      %s623 = smul.addr %s622, 4
      %s624 = scalar_lea.vmem %s9, %s623
      %p625 = scmp.lt.s32.totalorder %s29, 1
      %s626 = scalar_select %p625, %s29, 1
      %s627 = scalar_lea.vmem %s10, %s626
      %p628 = scmp.lt.s32.totalorder %s29, 1
      %s629 = scalar_select %p628, %s29, 1
      %s630 = smul.addr %s629, 16
      %s631 = smul.addr %s630, 4
      %s632 = scalar_lea.vmem %s11, %s631
      %p633 = scmp.lt.s32.totalorder %s29, 1
      %s634 = scalar_select %p633, %s29, 1
      %s635 = scalar_lea.vmem %s12, %s634
      %p636 = scmp.lt.s32.totalorder %s28, 1
      %s637 = scalar_select %p636, %s28, 1
      %s638 = smul.addr %s637, 8
      %s639 = scalar_lea.vmem %s13, %s638
      %p641 = scmp.eq.s32.totalorder %s29, 0
      // Predicated region
      $region73: #{vit_forward.4} parent=71 // pred_check
        %p642 = pneg %p641
      $region74: #{vit_forward.4} parent=71 // pred_check_branch
        %644 = sbr.rel (%p642) target = $region76
      $region75: #{vit_forward.4} parent=71 // pred_region
        %v645 = vld [vmem:[%s591] sm:$0xff]
        %vm646 = vcmask 261120
        %647 = vst.msk [vmem:[#allocation2] sm:$0xff] %vm646, %v645
      $region76: #{vit_forward.4} parent=71 // pred_fallthru
        _
      %v648 = vld [vmem:[#allocation2] sm:$0xff]
      %v649 = vld [vmem:[%s594] sm:$0x1]
      %v650 = vld [vmem:[%s597] sm:$0x1]
      %vm651 = vcmask 261120
      %v652 = vsel %vm651, %v648, 0.0
      %653 = vadd.xlane.f32.xlu0 %v652
      %v654 = vpop.xlane.xlu0 %653
      %v655 = vrcp.pop 32.0
      %v656 = vmul.f32 32.0, %v655
      %v657 = vsub.f32 1.0, %v656
      %v658 = vmul.f32 %v655, %v657
      %v659 = vadd.f32 %v655, %v658
      %vm660 = vweird.f32 %v655
      %v661 = vsel %vm660, %v655, %v659
      %v662 = vmul.f32 %v654, %v661
      %v663 = vsub.f32 %v648, %v662
      %v664 = vmul.f32 %v663, %v663
      %v665 = vsel %vm651, %v664, 0.0
      %666 = vadd.xlane.f32.xlu0 %v665
      %v667 = vpop.xlane.xlu0 %666
      %v668 = vmul.f32 %v667, %v661
      %v669 = vadd.f32 %v668, 1e-05
      %v670 = vrsqrt.pop %v669
      %v671 = vmul.f32 %v670, %v669
      %v672 = vmul.f32 %v671, %v670
      %v673 = vmul.f32 0.5, %v672
      %v674 = vsub.f32 1.5, %v673
      %v675 = vmul.f32 %v670, %v674
      %vm676 = vweird.f32 %v669
      %vm677 = vweird.f32 %v670
      %vm678 = vmor %vm676, %vm677
      %v679 = vsel %vm678, %v670, %v675
      %v680 = vmul.f32 %v663, %v679
      %v682 = vperm.slane %v649, 0
      %v684 = vmul.f32 %v680, %v682
      %v686 = vperm.slane %v650, 0
      %v688 = vadd.f32 %v684, %v686
      %v689 = vpack.c.bf16 %v688, %v688
      %v690 = vld [vmem:[%s602] sm:$0xf]
      %v691 = vld [vmem:[%s602 + $0x4] sm:$0xf]
      %v692 = vld [vmem:[%s602 + $0x8] sm:$0xf]
      %v693 = vld [vmem:[%s602 + $0xc] sm:$0xf]
      %v694 = vld [vmem:[%s605] sm:$0x1]
      %v696 = vperm.slane %v694, 0
      %v702 = vunpack.c.l.b16 %v690
      %v703 = vunpack.c.l.b16 %v691
      %v704 = vunpack.c.l.b16 %v692
      %v705 = vunpack.c.l.b16 %v693
      %v706 = vpack.c.b16 %v703, %v702
      %v707 = vpack.c.b16 %v705, %v704
      %v711 = vsel %vm651, %v689, 0
      %713 = vmatpush.bf16.msra.mxu0 0
      %714 = vmatpush.bf16.msra.mxu0 0
      %715 = vmatpush.bf16.msra.mxu0 0
      %716 = vmatpush.bf16.msra.mxu0 0
      %717 = vmatpush.bf16.msra.mxu0 0
      %718 = vmatpush.bf16.msra.mxu0 0
      %719 = vmatpush.bf16.msra.mxu0 %v707
      %720 = vmatpush.bf16.msra.mxu0 %v706
      %721 = vmatmul.bf16.gmra.mxu0 %v711
      %v722 = vpop.f32.mrf.mxu0
      %v723 = vadd.f32 %v696, %v722
      %v724 = vpop.f32.mrf.mxu0
      %725 = vdwg.mxu0
      %v726 = vpack.c.bf16 %v723, %v723
      %v728 = vunpack.c.l.b16 %v726
      %v729 = vpack.c.b16 %v728, %v728
      %730 = vrot.lane.b32.xlu0 %v729, 96
      %v731 = vpop.permute.xlu0 %730
      %vm732 = vcmask 64512
      %v734 = vsel %vm732, %v726, 0
      %v737 = vsel %vm732, %v731, 0
      %739 = vmatpush.bf16.xpose.msra.mxu0 0
      %740 = vmatpush.bf16.xpose.msra.mxu0 0
      %741 = vmatpush.bf16.xpose.msra.mxu0 0
      %742 = vmatpush.bf16.xpose.msra.mxu0 0
      %743 = vmatpush.bf16.xpose.msra.mxu0 0
      %744 = vmatpush.bf16.xpose.msra.mxu0 0
      %745 = vmatpush.bf16.xpose.msra.mxu0 0
      %746 = vmatpush.bf16.xpose.msra.mxu0 %v737
      %747 = vmatmul.bf16.gmra.mxu0 %v734
      %v748 = vpop.f32.mrf.mxu0
      %v749 = vadd.f32 0.0, %v748
      %v750 = vpop.f32.mrf.mxu0
      %751 = vdwg.mxu0
      %v752 = vsel %vm732, %v749, -inf
      %753 = vmax.xlane.f32.xlu0 %v752
      %v754 = vpop.xlane.xlu0 %753
      %v755 = vsub.f32 %v749, %v754
      %v756 = vmul.f32 %v755, 1.442695
      %v757 = vpow.pop %v756
      %v758 = vsel %vm732, %v757, 0.0
      %759 = vadd.xlane.f32.xlu0 %v758
      %v760 = vpop.xlane.xlu0 %759
      %v761 = vrcp.pop %v760
      %v762 = vmul.f32 %v757, %v761
      %v763 = vpack.c.bf16 %v762, %v762
      %764 = vrot.lane.b32.xlu0 %v729, 64
      %v765 = vpop.permute.xlu0 %764
      %v767 = vsel %vm732, %v763, 0
      %vm769 = vcmask 1043456
      %v771 = vsel %vm769, %v765, 0
      %773 = vmatpush.bf16.msra.mxu0 0
      %774 = vmatpush.bf16.msra.mxu0 0
      %775 = vmatpush.bf16.msra.mxu0 0
      %776 = vmatpush.bf16.msra.mxu0 0
      %777 = vmatpush.bf16.msra.mxu0 0
      %778 = vmatpush.bf16.msra.mxu0 0
      %779 = vmatpush.bf16.msra.mxu0 0
      %780 = vmatpush.bf16.msra.mxu0 %v771
      %781 = vmatmul.bf16.gmra.mxu0 %v767
      %v782 = vpop.f32.mrf.mxu0
      %v783 = vadd.f32 0.0, %v782
      %v784 = vpop.f32.mrf.mxu0
      %785 = vdwg.mxu0
      %v786 = vpack.c.bf16 %v783, %v783
      %vm787 = vcmask 60416
      %788 = vst.msk [vmem:[#allocation3] sm:$0xf] %vm787, %v786
      %789 = vrot.lane.b32.xlu0 %v729, 120
      %v790 = vpop.permute.xlu0 %789
      %791 = vrot.lane.b32.xlu0 %v729, 88
      %v792 = vpop.permute.xlu0 %791
      %v794 = vsel %vm732, %v790, 0
      %v797 = vsel %vm732, %v792, 0
      %799 = vmatpush.bf16.xpose.msra.mxu0 0
      %800 = vmatpush.bf16.xpose.msra.mxu0 0
      %801 = vmatpush.bf16.xpose.msra.mxu0 0
      %802 = vmatpush.bf16.xpose.msra.mxu0 0
      %803 = vmatpush.bf16.xpose.msra.mxu0 0
      %804 = vmatpush.bf16.xpose.msra.mxu0 0
      %805 = vmatpush.bf16.xpose.msra.mxu0 0
      %806 = vmatpush.bf16.xpose.msra.mxu0 %v797
      %807 = vmatmul.bf16.gmra.mxu0 %v794
      %v808 = vpop.f32.mrf.mxu0
      %v809 = vadd.f32 0.0, %v808
      %v810 = vpop.f32.mrf.mxu0
      %811 = vdwg.mxu0
      %v812 = vsel %vm732, %v809, -inf
      %813 = vmax.xlane.f32.xlu0 %v812
      %v814 = vpop.xlane.xlu0 %813
      %v815 = vsub.f32 %v809, %v814
      %v816 = vmul.f32 %v815, 1.442695
      %v817 = vpow.pop %v816
      %v818 = vsel %vm732, %v817, 0.0
      %819 = vadd.xlane.f32.xlu0 %v818
      %v820 = vpop.xlane.xlu0 %819
      %v821 = vrcp.pop %v820
      %v822 = vmul.f32 %v817, %v821
      %v823 = vpack.c.bf16 %v822, %v822
      %824 = vrot.lane.b32.xlu0 %v729, 56
      %v825 = vpop.permute.xlu0 %824
      %v827 = vsel %vm732, %v823, 0
      %v830 = vsel %vm769, %v825, 0
      %832 = vmatpush.bf16.msra.mxu0 0
      %833 = vmatpush.bf16.msra.mxu0 0
      %834 = vmatpush.bf16.msra.mxu0 0
      %835 = vmatpush.bf16.msra.mxu0 0
      %836 = vmatpush.bf16.msra.mxu0 0
      %837 = vmatpush.bf16.msra.mxu0 0
      %838 = vmatpush.bf16.msra.mxu0 0
      %839 = vmatpush.bf16.msra.mxu0 %v830
      %840 = vmatmul.bf16.gmra.mxu0 %v827
      %v841 = vpop.f32.mrf.mxu0
      %v842 = vadd.f32 0.0, %v841
      %v843 = vpop.f32.mrf.mxu0
      %844 = vdwg.mxu0
      %v845 = vpack.c.bf16 %v842, %v842
      %847 = vrot.lane.b32.xlu0 %v845, 8
      %v848 = vpop.permute.xlu0 %847
      %vm850 = vcmask 126016
      %851 = vst.msk [vmem:[#allocation3] sm:$0xf] %vm850, %v848
      %852 = vrot.lane.b32.xlu0 %v729, 112
      %v853 = vpop.permute.xlu0 %852
      %854 = vrot.lane.b32.xlu0 %v729, 80
      %v855 = vpop.permute.xlu0 %854
      %v857 = vsel %vm732, %v853, 0
      %v860 = vsel %vm732, %v855, 0
      %862 = vmatpush.bf16.xpose.msra.mxu0 0
      %863 = vmatpush.bf16.xpose.msra.mxu0 0
      %864 = vmatpush.bf16.xpose.msra.mxu0 0
      %865 = vmatpush.bf16.xpose.msra.mxu0 0
      %866 = vmatpush.bf16.xpose.msra.mxu0 0
      %867 = vmatpush.bf16.xpose.msra.mxu0 0
      %868 = vmatpush.bf16.xpose.msra.mxu0 0
      %869 = vmatpush.bf16.xpose.msra.mxu0 %v860
      %870 = vmatmul.bf16.gmra.mxu0 %v857
      %v871 = vpop.f32.mrf.mxu0
      %v872 = vadd.f32 0.0, %v871
      %v873 = vpop.f32.mrf.mxu0
      %874 = vdwg.mxu0
      %v875 = vsel %vm732, %v872, -inf
      %876 = vmax.xlane.f32.xlu0 %v875
      %v877 = vpop.xlane.xlu0 %876
      %v878 = vsub.f32 %v872, %v877
      %v879 = vmul.f32 %v878, 1.442695
      %v880 = vpow.pop %v879
      %v881 = vsel %vm732, %v880, 0.0
      %882 = vadd.xlane.f32.xlu0 %v881
      %v883 = vpop.xlane.xlu0 %882
      %v884 = vrcp.pop %v883
      %v885 = vmul.f32 %v880, %v884
      %v886 = vpack.c.bf16 %v885, %v885
      %887 = vrot.lane.b32.xlu0 %v729, 48
      %v888 = vpop.permute.xlu0 %887
      %v890 = vsel %vm732, %v886, 0
      %v893 = vsel %vm769, %v888, 0
      %895 = vmatpush.bf16.msra.mxu0 0
      %896 = vmatpush.bf16.msra.mxu0 0
      %897 = vmatpush.bf16.msra.mxu0 0
      %898 = vmatpush.bf16.msra.mxu0 0
      %899 = vmatpush.bf16.msra.mxu0 0
      %900 = vmatpush.bf16.msra.mxu0 0
      %901 = vmatpush.bf16.msra.mxu0 0
      %902 = vmatpush.bf16.msra.mxu0 %v893
      %903 = vmatmul.bf16.gmra.mxu0 %v890
      %v904 = vpop.f32.mrf.mxu0
      %v905 = vadd.f32 0.0, %v904
      %v906 = vpop.f32.mrf.mxu0
      %907 = vdwg.mxu0
      %v908 = vpack.c.bf16 %v905, %v905
      %910 = vrot.lane.b32.xlu0 %v908, 16
      %v911 = vpop.permute.xlu0 %910
      %vm913 = vcmask 191616
      %914 = vst.msk [vmem:[#allocation3] sm:$0xf] %vm913, %v911
      %915 = vrot.lane.b32.xlu0 %v729, 104
      %v916 = vpop.permute.xlu0 %915
      %917 = vrot.lane.b32.xlu0 %v729, 72
      %v918 = vpop.permute.xlu0 %917
      %v920 = vsel %vm732, %v916, 0
      %v923 = vsel %vm732, %v918, 0
      %925 = vmatpush.bf16.xpose.msra.mxu0 0
      %926 = vmatpush.bf16.xpose.msra.mxu0 0
      %927 = vmatpush.bf16.xpose.msra.mxu0 0
      %928 = vmatpush.bf16.xpose.msra.mxu0 0
      %929 = vmatpush.bf16.xpose.msra.mxu0 0
      %930 = vmatpush.bf16.xpose.msra.mxu0 0
      %931 = vmatpush.bf16.xpose.msra.mxu0 0
      %932 = vmatpush.bf16.xpose.msra.mxu0 %v923
      %933 = vmatmul.bf16.gmra.mxu0 %v920
      %v934 = vpop.f32.mrf.mxu0
      %v935 = vadd.f32 0.0, %v934
      %v936 = vpop.f32.mrf.mxu0
      %937 = vdwg.mxu0
      %v938 = vsel %vm732, %v935, -inf
      %939 = vmax.xlane.f32.xlu0 %v938
      %v940 = vpop.xlane.xlu0 %939
      %v941 = vsub.f32 %v935, %v940
      %v942 = vmul.f32 %v941, 1.442695
      %v943 = vpow.pop %v942
      %v944 = vsel %vm732, %v943, 0.0
      %945 = vadd.xlane.f32.xlu0 %v944
      %v946 = vpop.xlane.xlu0 %945
      %v947 = vrcp.pop %v946
      %v948 = vmul.f32 %v943, %v947
      %v949 = vpack.c.bf16 %v948, %v948
      %950 = vrot.lane.b32.xlu0 %v729, 40
      %v951 = vpop.permute.xlu0 %950
      %v953 = vsel %vm732, %v949, 0
      %v956 = vsel %vm769, %v951, 0
      %958 = vmatpush.bf16.msra.mxu0 0
      %959 = vmatpush.bf16.msra.mxu0 0
      %960 = vmatpush.bf16.msra.mxu0 0
      %961 = vmatpush.bf16.msra.mxu0 0
      %962 = vmatpush.bf16.msra.mxu0 0
      %963 = vmatpush.bf16.msra.mxu0 0
      %964 = vmatpush.bf16.msra.mxu0 0
      %965 = vmatpush.bf16.msra.mxu0 %v956
      %966 = vmatmul.bf16.gmra.mxu0 %v953
      %v967 = vpop.f32.mrf.mxu0
      %v968 = vadd.f32 0.0, %v967
      %v969 = vpop.f32.mrf.mxu0
      %970 = vdwg.mxu0
      %v971 = vpack.c.bf16 %v968, %v968
      %973 = vrot.lane.b32.xlu0 %v971, 24
      %v974 = vpop.permute.xlu0 %973
      %vm976 = vcmask 257216
      %977 = vst.msk [vmem:[#allocation3] sm:$0xf] %vm976, %v974
      %v978 = vld [vmem:[#allocation3] sm:$0xf]
      %v979 = vld [vmem:[%s610] sm:$0xf]
      %v980 = vld [vmem:[%s610 + $0x4] sm:$0xf]
      %v981 = vld [vmem:[%s610 + $0x8] sm:$0xf]
      %v982 = vld [vmem:[%s610 + $0xc] sm:$0xf]
      %v983 = vld [vmem:[%s613] sm:$0x1]
      %v985 = vperm.slane %v983, 0
      %v991 = vunpack.c.l.b16 %v979
      %v992 = vunpack.c.l.b16 %v980
      %v993 = vunpack.c.l.b16 %v981
      %v994 = vunpack.c.l.b16 %v982
      %v995 = vpack.c.b16 %v992, %v991
      %v996 = vpack.c.b16 %v994, %v993
      %v1000 = vsel %vm651, %v978, 0
      %1002 = vmatpush.bf16.msra.mxu0 0
      %1003 = vmatpush.bf16.msra.mxu0 0
      %1004 = vmatpush.bf16.msra.mxu0 0
      %1005 = vmatpush.bf16.msra.mxu0 0
      %1006 = vmatpush.bf16.msra.mxu0 0
      %1007 = vmatpush.bf16.msra.mxu0 0
      %1008 = vmatpush.bf16.msra.mxu0 %v996
      %1009 = vmatpush.bf16.msra.mxu0 %v995
      %1010 = vmatmul.bf16.gmra.mxu0 %v1000
      %v1011 = vpop.f32.mrf.mxu0
      %v1012 = vadd.f32 %v985, %v1011
      %v1013 = vpop.f32.mrf.mxu0
      %1014 = vdwg.mxu0
      %v1015 = vadd.f32 %v648, %v1012
      %v1016 = vld [vmem:[%s616] sm:$0x1]
      %v1017 = vld [vmem:[%s619] sm:$0x1]
      %v1018 = vsel %vm651, %v1015, 0.0
      %1019 = vadd.xlane.f32.xlu0 %v1018
      %v1020 = vpop.xlane.xlu0 %1019
      %v1021 = vmul.f32 %v1020, %v661
      %v1022 = vsub.f32 %v1015, %v1021
      %v1023 = vmul.f32 %v1022, %v1022
      %v1024 = vsel %vm651, %v1023, 0.0
      %1025 = vadd.xlane.f32.xlu0 %v1024
      %v1026 = vpop.xlane.xlu0 %1025
      %v1027 = vmul.f32 %v1026, %v661
      %v1028 = vadd.f32 %v1027, 1e-05
      %v1029 = vrsqrt.pop %v1028
      %v1030 = vmul.f32 %v1029, %v1028
      %v1031 = vmul.f32 %v1030, %v1029
      %v1032 = vmul.f32 0.5, %v1031
      %v1033 = vsub.f32 1.5, %v1032
      %v1034 = vmul.f32 %v1029, %v1033
      %vm1035 = vweird.f32 %v1028
      %vm1036 = vweird.f32 %v1029
      %vm1037 = vmor %vm1035, %vm1036
      %v1038 = vsel %vm1037, %v1029, %v1034
      %v1039 = vmul.f32 %v1022, %v1038
      %v1041 = vperm.slane %v1016, 0
      %v1043 = vmul.f32 %v1039, %v1041
      %v1045 = vperm.slane %v1017, 0
      %v1047 = vadd.f32 %v1043, %v1045
      %v1048 = vpack.c.bf16 %v1047, %v1047
      %v1049 = vld [vmem:[%s624] sm:$0xf]
      %v1050 = vld [vmem:[%s624 + $0x4] sm:$0xf]
      %v1051 = vld [vmem:[%s624 + $0x8] sm:$0xf]
      %v1052 = vld [vmem:[%s624 + $0xc] sm:$0xf]
      %v1053 = vld [vmem:[%s627] sm:$0x1]
      %v1055 = vperm.slane %v1053, 0
      %v1061 = vunpack.c.l.b16 %v1049
      %v1062 = vunpack.c.l.b16 %v1050
      %v1063 = vunpack.c.l.b16 %v1051
      %v1064 = vunpack.c.l.b16 %v1052
      %v1065 = vpack.c.b16 %v1062, %v1061
      %v1066 = vpack.c.b16 %v1064, %v1063
      %v1070 = vsel %vm651, %v1048, 0
      %1072 = vmatpush.bf16.msra.mxu0 0
      %1073 = vmatpush.bf16.msra.mxu0 0
      %1074 = vmatpush.bf16.msra.mxu0 0
      %1075 = vmatpush.bf16.msra.mxu0 0
      %1076 = vmatpush.bf16.msra.mxu0 0
      %1077 = vmatpush.bf16.msra.mxu0 0
      %1078 = vmatpush.bf16.msra.mxu0 %v1066
      %1079 = vmatpush.bf16.msra.mxu0 %v1065
      %1080 = vmatmul.bf16.gmra.mxu0 %v1070
      %v1081 = vpop.f32.mrf.mxu0
      %v1082 = vadd.f32 %v1055, %v1081
      %v1083 = vpop.f32.mrf.mxu0
      %1084 = vdwg.mxu0
      %v1085 = vmul.f32 %v1082, 0.5
      %v1086 = vmul.f32 %v1082, 0.044715
      %v1087 = vmul.f32 %v1086, %v1082
      %v1088 = vmul.f32 %v1087, %v1082
      %v1089 = vadd.f32 %v1082, %v1088
      %v1090 = vmul.f32 %v1089, 0.7978846
      %v1091 = vtanh.pop %v1090
      %v1092 = vadd.f32 %v1091, 1.0
      %v1093 = vmul.f32 %v1085, %v1092
      %v1094 = vpack.c.bf16 %v1093, %v1093
      %v1095 = vld [vmem:[%s632] sm:$0xf]
      %v1096 = vld [vmem:[%s632 + $0x4] sm:$0xf]
      %v1097 = vld [vmem:[%s632 + $0x8] sm:$0xf]
      %v1098 = vld [vmem:[%s632 + $0xc] sm:$0xf]
      %v1099 = vld [vmem:[%s632 + $0x10] sm:$0xf]
      %v1100 = vld [vmem:[%s632 + $0x14] sm:$0xf]
      %v1101 = vld [vmem:[%s632 + $0x18] sm:$0xf]
      %v1102 = vld [vmem:[%s632 + $0x1c] sm:$0xf]
      %v1103 = vld [vmem:[%s632 + $0x20] sm:$0xf]
      %v1104 = vld [vmem:[%s632 + $0x24] sm:$0xf]
      %v1105 = vld [vmem:[%s632 + $0x28] sm:$0xf]
      %v1106 = vld [vmem:[%s632 + $0x2c] sm:$0xf]
      %v1107 = vld [vmem:[%s632 + $0x30] sm:$0xf]
      %v1108 = vld [vmem:[%s632 + $0x34] sm:$0xf]
      %v1109 = vld [vmem:[%s632 + $0x38] sm:$0xf]
      %v1110 = vld [vmem:[%s632 + $0x3c] sm:$0xf]
      %v1111 = vld [vmem:[%s635] sm:$0x1]
      %v1113 = vperm.slane %v1111, 0
      %v1131 = vunpack.c.l.b16 %v1095
      %v1132 = vunpack.c.l.b16 %v1096
      %v1133 = vunpack.c.l.b16 %v1097
      %v1134 = vunpack.c.l.b16 %v1098
      %v1135 = vunpack.c.l.b16 %v1099
      %v1136 = vunpack.c.l.b16 %v1100
      %v1137 = vunpack.c.l.b16 %v1101
      %v1138 = vunpack.c.l.b16 %v1102
      %v1139 = vunpack.c.l.b16 %v1103
      %v1140 = vunpack.c.l.b16 %v1104
      %v1141 = vunpack.c.l.b16 %v1105
      %v1142 = vunpack.c.l.b16 %v1106
      %v1143 = vunpack.c.l.b16 %v1107
      %v1144 = vunpack.c.l.b16 %v1108
      %v1145 = vunpack.c.l.b16 %v1109
      %v1146 = vunpack.c.l.b16 %v1110
      %v1147 = vpack.c.b16 %v1132, %v1131
      %v1148 = vpack.c.b16 %v1134, %v1133
      %v1149 = vpack.c.b16 %v1136, %v1135
      %v1150 = vpack.c.b16 %v1138, %v1137
      %v1151 = vpack.c.b16 %v1140, %v1139
      %v1152 = vpack.c.b16 %v1142, %v1141
      %v1153 = vpack.c.b16 %v1144, %v1143
      %v1154 = vpack.c.b16 %v1146, %v1145
      %1163 = vmatpush.bf16.msra.mxu0 %v1154
      %1164 = vmatpush.bf16.msra.mxu0 %v1153
      %1165 = vmatpush.bf16.msra.mxu0 %v1152
      %1166 = vmatpush.bf16.msra.mxu0 %v1151
      %1167 = vmatpush.bf16.msra.mxu0 %v1150
      %1168 = vmatpush.bf16.msra.mxu0 %v1149
      %1169 = vmatpush.bf16.msra.mxu0 %v1148
      %1170 = vmatpush.bf16.msra.mxu0 %v1147
      %1171 = vmatmul.bf16.gmra.mxu0 %v1094
      %v1172 = vpop.f32.mrf.mxu0
      %v1173 = vadd.f32 %v1113, %v1172
      %v1174 = vpop.f32.mrf.mxu0
      %1175 = vdwg.mxu0
      %v1176 = vadd.f32 %v1015, %v1173
      %1177 = vst.msk [vmem:[#allocation2] sm:$0xff] %vm651, %v1176
      %p1178 = scmp.eq.s32.totalorder %s29, 1
      // Predicated region
      $region77: #{vit_forward.4} parent=71 // pred_check
        %p1179 = pneg %p1178
      $region78: #{vit_forward.4} parent=71 // pred_check_branch
        %1181 = sbr.rel (%p1179) target = $region80
      $region79: #{vit_forward.4} parent=71 // pred_region
        %1182 = vst.msk [vmem:[%s639] sm:$0xff] %vm651, %v1176
      $region80: #{vit_forward.4} parent=71 // pred_fallthru
        _
      %p1183 = scmp.lt.s32.totalorder %s28, 1
      %s1184 = scalar_select %p1183, %s28, 1
      %s1185 = smul.addr %s1184, 8
      %s1186 = scalar_lea.vmem %s13, %s1185
      // Predicated region
      $region81: #{vit_forward.4} parent=71 // pred_check
        %p1187 = pneg %p392
      $region82: #{vit_forward.4} parent=71 // pred_check_branch
        %1189 = sbr.rel (%p1187) target = $region84
      $region83: #{vit_forward.4} parent=71 // pred_region
        _
      $region84: #{vit_forward.4} parent=71 // pred_fallthru
        _
    $region72: #{vit_forward.4} parent=5 // pred_fallthru
      _
    %p1190 = scmp.le.s32.totalorder 2, %s19
    // Predicated region
    $region85: #{vit_forward.4} parent=5 // pred_check
      %p1191 = pneg %p1190
    $region86: #{vit_forward.4} parent=5 // pred_check_branch
      %1193 = sbr.rel (%p1191) target = $region88
    $region87: #{vit_forward.4} parent=5 // pred_region
      %s1194 = ssub.s32 %s19, 2
      // Predicated region
      $region89: #{vit_forward.4} parent=87 // pred_check
        %p1195 = pneg %p398
      $region90: #{vit_forward.4} parent=87 // pred_check_branch
        %1197 = sbr.rel (%p1195) target = $region92
      $region91: #{vit_forward.4} parent=87 // pred_region
        %p1198 = scmp.lt.s32.totalorder %s30, 1
        %s1199 = scalar_select %p1198, %s30, 1
        %s1200 = smul.addr %s1199, 8
        %s1201 = scalar_lea.vmem %s13, %s1200
      $region92: #{vit_forward.4} parent=87 // pred_fallthru
        _
    $region88: #{vit_forward.4} parent=5 // pred_fallthru
      _
  $region6: #{vit_forward.4} parent=0 // loop_footer
    %s23 = sadd.s32 1, %s19
  $region7: #{vit_forward.4} parent=0 // loop_footer_branch
    %18 = sbr.rel target = $region3
  $region8: #{vit_forward.4} parent=0 // loop_exit
    _

</llo_original>
